<compile_context>
chip_gen: v7x
topology: tpu7x:2x2x1
jax: 0.10.0
libtpu: 0.0.40
codegen_flags: <defaults>
</compile_context>

<pallas_src>
import functools

import jax
import jax.numpy as jnp
from jax.experimental import pallas as pl
from jax.experimental.pallas import tpu as pltpu


def _round_up(x: int, m: int) -> int:
    return ((x + m - 1) // m) * m


def _dan_kernel(counts_ref, emb_ref, w1_ref, b1_ref, w2_ref, b2_ref,
                out_ref, acc_ref, *, n_valid_classes: int, is_prob: bool,
                precision):
    k = pl.program_id(1)

    @pl.when(k == 0)
    def _init():
        acc_ref[...] = jnp.zeros_like(acc_ref)

    # Bag-of-words (already scaled by 1/len) on the MXU: (TB,TV) @ (TV,Ep).
    acc_ref[...] += jnp.dot(counts_ref[...], emb_ref[...],
                            preferred_element_type=jnp.float32,
                            precision=precision)

    @pl.when(k == pl.num_programs(1) - 1)
    def _finish():
        encoded = acc_ref[...]                                   # (TB, Ep) f32

        # linear1 + ReLU   (dropout = identity in eval)
        h = jnp.dot(encoded.astype(w1_ref.dtype), w1_ref[...],
                    preferred_element_type=jnp.float32,
                    precision=precision) + b1_ref[...]
        h = jnp.maximum(h, 0.0)

        # linear2
        logits = jnp.dot(h.astype(w2_ref.dtype), w2_ref[...],
                         preferred_element_type=jnp.float32,
                         precision=precision) + b2_ref[...]

        if is_prob:
            # Mask padded class lanes so they get probability ~0.
            col = jax.lax.broadcasted_iota(jnp.int32, logits.shape, 1)
            logits = jnp.where(col < n_valid_classes, logits, -1e30)
            m = jnp.max(logits, axis=-1, keepdims=True)
            e = jnp.exp(logits - m)
            logits = e * pl.reciprocal(jnp.sum(e, axis=-1, keepdims=True),
                                       approx=True)

        out_ref[...] = logits.astype(out_ref.dtype)


def dan_forward(input_text, text_len, params, *, is_prob=False,
                param_dtype=jnp.float32, block_b=128, block_v=512):
    """Forward pass of DanModel (eval mode).

    input_text: (B, L) int32 token ids
    text_len:   (B,) or (B, 1) lengths
    params: dict with 'embedding' (V, E), 'w1' (E, H), 'b1' (H,),
            'w2' (H, C), 'b2' (C,)
    returns logits (B, C)  (or softmax probs if is_prob)
    """
    input_text = jnp.asarray(input_text, jnp.int32)
    B, L = input_text.shape
    V, E = params["embedding"].shape
    H = params["w1"].shape[1]
    C = params["w2"].shape[1]

    itemsize = jnp.dtype(param_dtype).itemsize
    Ep = _round_up(E, 128)
    Hp = _round_up(H, 128)
    Cp = _round_up(C, 128)

    # Batch tile (sublane dim, multiple of 8); vocab tile (lane dim, mult 128).
    tb = min(_round_up(block_b, 8), _round_up(B, 8))
    tv = min(_round_up(block_v, 128), _round_up(V, 128))

    # Keep the double-buffered working set ~<= 24 MiB (safe for v7x's 64 MiB
    # physical VMEM; v5e/v6e have more headroom and simply pipeline deeper).
    def vmem_est(tb_, tv_):
        stream = 2 * (tb_ * tv_ + tv_ * Ep) * itemsize + 2 * tb_ * Cp * 4
        resident = 2 * ((Ep * Hp + Hp * Cp) * itemsize + (Hp + Cp) * 4)
        scratch = tb_ * Ep * 4
        return stream + resident + scratch

    budget = 24 * 1024 * 1024
    while vmem_est(tb, tv) > budget and tv > 128:
        tv = max(128, _round_up(tv // 2, 128))
    while vmem_est(tb, tv) > budget and tb > 8:
        tb = max(8, _round_up(tb // 2, 8))

    b_pad = _round_up(B, tb)
    v_pad = _round_up(V, tv)

    # Build 1/len-scaled token counts: encoded = counts @ embedding equals
    # (sum_l emb[token_l]) / len exactly (padding token 0 has a zero row).
    inv_len = 1.0 / jnp.asarray(text_len, jnp.float32).reshape(B)
    rows = jnp.arange(B, dtype=jnp.int32)[:, None]
    counts = jnp.zeros((b_pad, v_pad), jnp.float32)
    counts = counts.at[rows, input_text].add(
        jnp.broadcast_to(inv_len[:, None], (B, L)))
    counts = counts.astype(param_dtype)

    # Zero-padded, lane-dense parameters (padding is mathematically inert).
    emb = jnp.zeros((v_pad, Ep), param_dtype).at[:V, :E].set(
        params["embedding"].astype(param_dtype))
    w1 = jnp.zeros((Ep, Hp), param_dtype).at[:E, :H].set(
        params["w1"].astype(param_dtype))
    w2 = jnp.zeros((Hp, Cp), param_dtype).at[:H, :C].set(
        params["w2"].astype(param_dtype))
    b1 = jnp.zeros((1, Hp), jnp.float32).at[0, :H].set(
        params["b1"].astype(jnp.float32))
    b2 = jnp.zeros((1, Cp), jnp.float32).at[0, :C].set(
        params["b2"].astype(jnp.float32))

    precision = (jax.lax.Precision.HIGHEST
                 if jnp.dtype(param_dtype) == jnp.float32
                 else jax.lax.Precision.DEFAULT)
    kernel = functools.partial(_dan_kernel, n_valid_classes=C,
                               is_prob=is_prob, precision=precision)

    grid = (b_pad // tb, v_pad // tv)
    vmem_limit = int(min(max(2 * vmem_est(tb, tv), 16 * 1024 * 1024),
                         64 * 1024 * 1024))

    out = pl.pallas_call(
        kernel,
        out_shape=jax.ShapeDtypeStruct((b_pad, Cp), jnp.float32),
        grid=grid,
        in_specs=[
            pl.BlockSpec((tb, tv), lambda i, k: (i, k)),   # counts (streamed)
            pl.BlockSpec((tv, Ep), lambda i, k: (k, 0)),   # embedding tile
            pl.BlockSpec((Ep, Hp), lambda i, k: (0, 0)),   # w1 (resident)
            pl.BlockSpec((1, Hp), lambda i, k: (0, 0)),    # b1 (resident)
            pl.BlockSpec((Hp, Cp), lambda i, k: (0, 0)),   # w2 (resident)
            pl.BlockSpec((1, Cp), lambda i, k: (0, 0)),    # b2 (resident)
        ],
        out_specs=pl.BlockSpec((tb, Cp), lambda i, k: (i, 0)),
        scratch_shapes=[pltpu.VMEM((tb, Ep), jnp.float32)],
        compiler_params=pltpu.CompilerParams(
            dimension_semantics=("parallel", "arbitrary"),
            vmem_limit_bytes=vmem_limit),
    )(counts, emb, w1, b1, w2, b2)

    return out[:B, :C]


def init_params(key, n_classes, vocab_size, emb_dim, n_hidden_units):
    """Deterministic init mimicking PyTorch defaults (synthetic weights)."""
    k_emb, k_w1, k_b1, k_w2, k_b2 = jax.random.split(key, 5)

    # nn.Embedding: N(0, 1), padding_idx=0 row zeroed.
    emb = jax.random.normal(k_emb, (vocab_size, emb_dim), jnp.float32)
    emb = emb.at[0].set(0.0)

    # nn.Linear: U(-1/sqrt(fan_in), 1/sqrt(fan_in)); stored as (in, out).
    lim1 = 1.0 / jnp.sqrt(jnp.float32(emb_dim))
    w1 = jax.random.uniform(k_w1, (emb_dim, n_hidden_units), jnp.float32,
                            -lim1, lim1)
    b1 = jax.random.uniform(k_b1, (n_hidden_units,), jnp.float32, -lim1, lim1)

    lim2 = 1.0 / jnp.sqrt(jnp.float32(n_hidden_units))
    w2 = jax.random.uniform(k_w2, (n_hidden_units, n_classes), jnp.float32,
                            -lim2, lim2)
    b2 = jax.random.uniform(k_b2, (n_classes,), jnp.float32, -lim2, lim2)

    return {"embedding": emb, "w1": w1, "b1": b1, "w2": w2, "b2": b2}


def dan_reference(input_text, text_len, params, *, is_prob=False):
    """Pure-JAX reference (mirrors the PyTorch forward)."""
    text_embed = jnp.take(params["embedding"], input_text, axis=0)
    encoded = text_embed.sum(axis=1)
    encoded = encoded / jnp.asarray(text_len, jnp.float32).reshape(-1, 1)
    h = jnp.maximum(
        jnp.dot(encoded, params["w1"],
                precision=jax.lax.Precision.HIGHEST) + params["b1"], 0.0)
    logits = jnp.dot(h, params["w2"],
                     precision=jax.lax.Precision.HIGHEST) + params["b2"]
    if is_prob:
        logits = jax.nn.softmax(logits, axis=-1)
    return logits


if __name__ == "__main__":
    n_classes = 10
    vocab_size = 100
    emb_dim = 32
    n_hidden_units = 32
    batch = 2
    seq_len = 8

    key = jax.random.PRNGKey(0)
    k_params, k_text, k_len = jax.random.split(key, 3)

    params = init_params(k_params, n_classes, vocab_size, emb_dim,
                         n_hidden_units)

    input_text = jax.random.randint(k_text, (batch, seq_len), 0, vocab_size,
                                    dtype=jnp.int32)
    text_len = jax.random.randint(k_len, (batch,), 1, seq_len + 1,
                                  dtype=jnp.int32).astype(jnp.float32)

    ref_logits = dan_reference(input_text, text_len, params, is_prob=False)
    ref_probs = dan_reference(input_text, text_len, params, is_prob=True)

    # f32 storage path: logits + softmax.
    logits = jax.block_until_ready(
        dan_forward(input_text, text_len, params, is_prob=False,
                    param_dtype=jnp.float32))
    probs = jax.block_until_ready(
        dan_forward(input_text, text_len, params, is_prob=True,
                    param_dtype=jnp.float32))
    assert logits.shape == (batch, n_classes)
    assert jnp.allclose(logits, ref_logits, atol=2e-3, rtol=2e-3), "logits f32"
    assert jnp.allclose(probs, ref_probs, atol=5e-3, rtol=5e-3), "probs f32"

    # bf16 storage path (halves HBM traffic); compare loosely vs f32 reference.
    logits_bf16 = jax.block_until_ready(
        dan_forward(input_text, text_len, params, is_prob=False,
                    param_dtype=jnp.bfloat16))
    assert jnp.allclose(logits_bf16, ref_logits, atol=1.5e-1, rtol=1.5e-1), \
        "logits bf16"

    print("KERNEL_OK")
</pallas_src>

<mosaic_0001>
module attributes {stable_mosaic.version = 11 : i64} {
  func.func @_dan_kernel(%arg0: i32, %arg1: i32, %arg2: memref<8x128xf32, #tpu.memory_space<vmem>>, %arg3: memref<128x128xf32, #tpu.memory_space<vmem>>, %arg4: memref<128x128xf32, #tpu.memory_space<vmem>>, %arg5: memref<1x128xf32, #tpu.memory_space<vmem>>, %arg6: memref<128x128xf32, #tpu.memory_space<vmem>>, %arg7: memref<1x128xf32, #tpu.memory_space<vmem>>, %arg8: memref<8x128xf32, #tpu.memory_space<vmem>>, %arg9: memref<8x128xf32, #tpu.memory_space<vmem>>) attributes {dimension_semantics = [#tpu.dimension_semantics<parallel>, #tpu.dimension_semantics<arbitrary>], iteration_bounds = array<i64: 1, 1>, scalar_prefetch = 0 : i64, scratch_operands = 1 : i64, tpu.core_type = #tpu.core_type<tc>, window_params = [{transform_indices = @transform_0, window_bounds = array<i64: 8, 128>}, {transform_indices = @transform_1, window_bounds = array<i64: 128, 128>}, {pipeline_mode = #tpu.pipeline_mode<synchronous>, transform_indices = @transform_2, window_bounds = array<i64: 128, 128>}, {pipeline_mode = #tpu.pipeline_mode<synchronous>, transform_indices = @transform_3, window_bounds = array<i64: 1, 128>}, {pipeline_mode = #tpu.pipeline_mode<synchronous>, transform_indices = @transform_4, window_bounds = array<i64: 128, 128>}, {pipeline_mode = #tpu.pipeline_mode<synchronous>, transform_indices = @transform_5, window_bounds = array<i64: 1, 128>}, {transform_indices = @transform_6, window_bounds = array<i64: 8, 128>}]} {
    %c0_i32 = arith.constant 0 : i32
    %0 = arith.cmpi eq, %arg1, %c0_i32 : i32
    %1 = arith.extui %0 : i1 to i32
    %c0_i32_0 = arith.constant 0 : i32
    %2 = arith.cmpi ne, %1, %c0_i32_0 : i32
    scf.if %2 {
      %cst_10 = arith.constant 0.000000e+00 : f32
      %12 = vector.broadcast %cst_10 : f32 to vector<8x128xf32>
      %c0_11 = arith.constant 0 : index
      %c0_12 = arith.constant 0 : index
      %13 = vector.load %arg9[%c0_11, %c0_12] : memref<8x128xf32, #tpu.memory_space<vmem>>, vector<8x128xf32>
      tpu.vector_store %arg9[%c0_11, %c0_12], %12 {strides = array<i32>} : memref<8x128xf32, #tpu.memory_space<vmem>>, vector<8x128xf32>,
    } else {
    }
    %c0 = arith.constant 0 : index
    %c0_1 = arith.constant 0 : index
    %3 = vector.load %arg9[%c0, %c0_1] : memref<8x128xf32, #tpu.memory_space<vmem>>, vector<8x128xf32>
    %c0_2 = arith.constant 0 : index
    %c0_3 = arith.constant 0 : index
    %4 = vector.load %arg2[%c0_2, %c0_3] : memref<8x128xf32, #tpu.memory_space<vmem>>, vector<8x128xf32>
    %c0_4 = arith.constant 0 : index
    %c0_5 = arith.constant 0 : index
    %5 = vector.load %arg3[%c0_4, %c0_5] : memref<128x128xf32, #tpu.memory_space<vmem>>, vector<128x128xf32>
    %cst = arith.constant dense<0.000000e+00> : vector<8x128xf32>
    %6 = tpu.matmul %4, %5, %cst {dimension_numbers = #tpu.dot_dimension_numbers<[1], [0], [0], [1], [0, 0, 1, 1], [], []>, precision = #tpu.contract_precision<fp32>} : vector<8x128xf32>, vector<128x128xf32>, vector<8x128xf32> -> vector<8x128xf32>
    %7 = arith.addf %3, %6 : vector<8x128xf32>
    %c0_6 = arith.constant 0 : index
    %c0_7 = arith.constant 0 : index
    %8 = vector.load %arg9[%c0_6, %c0_7] : memref<8x128xf32, #tpu.memory_space<vmem>>, vector<8x128xf32>
    tpu.vector_store %arg9[%c0_6, %c0_7], %7 {strides = array<i32>} : memref<8x128xf32, #tpu.memory_space<vmem>>, vector<8x128xf32>,
    %c0_i32_8 = arith.constant 0 : i32
    %9 = arith.cmpi eq, %arg1, %c0_i32_8 : i32
    %10 = arith.extui %9 : i1 to i32
    %c0_i32_9 = arith.constant 0 : i32
    %11 = arith.cmpi ne, %10, %c0_i32_9 : i32
    scf.if %11 {
      %c0_10 = arith.constant 0 : index
      %c0_11 = arith.constant 0 : index
      %12 = vector.load %arg9[%c0_10, %c0_11] : memref<8x128xf32, #tpu.memory_space<vmem>>, vector<8x128xf32>
      %c0_12 = arith.constant 0 : index
      %c0_13 = arith.constant 0 : index
      %13 = vector.load %arg4[%c0_12, %c0_13] : memref<128x128xf32, #tpu.memory_space<vmem>>, vector<128x128xf32>
      %cst_14 = arith.constant dense<0.000000e+00> : vector<8x128xf32>
      %14 = tpu.matmul %12, %13, %cst_14 {dimension_numbers = #tpu.dot_dimension_numbers<[1], [0], [0], [1], [0, 0, 1, 1], [], []>, precision = #tpu.contract_precision<fp32>} : vector<8x128xf32>, vector<128x128xf32>, vector<8x128xf32> -> vector<8x128xf32>
      %c0_15 = arith.constant 0 : index
      %c0_16 = arith.constant 0 : index
      %15 = vector.load %arg5[%c0_15, %c0_16] : memref<1x128xf32, #tpu.memory_space<vmem>>, vector<1x128xf32>
      %16 = vector.broadcast %15 : vector<1x128xf32> to vector<8x128xf32>
      %17 = arith.addf %14, %16 : vector<8x128xf32>
      %cst_17 = arith.constant 0.000000e+00 : f32
      %18 = vector.broadcast %cst_17 : f32 to vector<8x128xf32>
      %19 = arith.maximumf %17, %18 : vector<8x128xf32>
      %c0_18 = arith.constant 0 : index
      %c0_19 = arith.constant 0 : index
      %20 = vector.load %arg6[%c0_18, %c0_19] : memref<128x128xf32, #tpu.memory_space<vmem>>, vector<128x128xf32>
      %cst_20 = arith.constant dense<0.000000e+00> : vector<8x128xf32>
      %21 = tpu.matmul %19, %20, %cst_20 {dimension_numbers = #tpu.dot_dimension_numbers<[1], [0], [0], [1], [0, 0, 1, 1], [], []>, precision = #tpu.contract_precision<fp32>} : vector<8x128xf32>, vector<128x128xf32>, vector<8x128xf32> -> vector<8x128xf32>
      %c0_21 = arith.constant 0 : index
      %c0_22 = arith.constant 0 : index
      %22 = vector.load %arg7[%c0_21, %c0_22] : memref<1x128xf32, #tpu.memory_space<vmem>>, vector<1x128xf32>
      %23 = vector.broadcast %22 : vector<1x128xf32> to vector<8x128xf32>
      %24 = arith.addf %21, %23 : vector<8x128xf32>
      %c0_23 = arith.constant 0 : index
      %c0_24 = arith.constant 0 : index
      %25 = vector.load %arg8[%c0_23, %c0_24] : memref<8x128xf32, #tpu.memory_space<vmem>>, vector<8x128xf32>
      tpu.vector_store %arg8[%c0_23, %c0_24], %24 {strides = array<i32>} : memref<8x128xf32, #tpu.memory_space<vmem>>, vector<8x128xf32>,
    } else {
    }
    return
  }
  func.func @transform_0(%arg0: i32, %arg1: i32) -> (i32, i32) {
    %c0_i32 = arith.constant 0 : i32
    return %arg0, %arg1 : i32, i32
  }
  func.func @transform_1(%arg0: i32, %arg1: i32) -> (i32, i32) {
    %c0_i32 = arith.constant 0 : i32
    %c0_i32_0 = arith.constant 0 : i32
    return %arg1, %c0_i32 : i32, i32
  }
  func.func @transform_2(%arg0: i32, %arg1: i32) -> (i32, i32) {
    %c0_i32 = arith.constant 0 : i32
    %c0_i32_0 = arith.constant 0 : i32
    %c0_i32_1 = arith.constant 0 : i32
    return %c0_i32, %c0_i32_0 : i32, i32
  }
  func.func @transform_3(%arg0: i32, %arg1: i32) -> (i32, i32) {
    %c0_i32 = arith.constant 0 : i32
    %c0_i32_0 = arith.constant 0 : i32
    %c0_i32_1 = arith.constant 0 : i32
    return %c0_i32, %c0_i32_0 : i32, i32
  }
  func.func @transform_4(%arg0: i32, %arg1: i32) -> (i32, i32) {
    %c0_i32 = arith.constant 0 : i32
    %c0_i32_0 = arith.constant 0 : i32
    %c0_i32_1 = arith.constant 0 : i32
    return %c0_i32, %c0_i32_0 : i32, i32
  }
  func.func @transform_5(%arg0: i32, %arg1: i32) -> (i32, i32) {
    %c0_i32 = arith.constant 0 : i32
    %c0_i32_0 = arith.constant 0 : i32
    %c0_i32_1 = arith.constant 0 : i32
    return %c0_i32, %c0_i32_0 : i32, i32
  }
  func.func @transform_6(%arg0: i32, %arg1: i32) -> (i32, i32) {
    %c0_i32 = arith.constant 0 : i32
    %c0_i32_0 = arith.constant 0 : i32
    return %arg0, %c0_i32 : i32, i32
  }
}

</mosaic_0001>

<llo_original>
// kernel: tpu_custom_call.1
$region0: #{tpu_custom_call.1}
  #allocation0 [shape = 'u32[]', space=smem, size = 0x4, offset = 0x4, fixed_abs, tag = 'smem constant byte address 0x4 - core index']
  #allocation1 [shape = 'u32[144,128]{1,0:T(1,128)}', space=vmem, size = 0x12000, scoped, tag = 'internal scratch']
  #allocation2 [shape = 'f32[8,128]{1,0:T(8,128)}', space=vmem, size = 0x1000, scoped, tag = 'scratch operand']
  %s0 = inlined_call_operand.hbm [shape: f32[8,128], index: 0, kind: input, shape index: {}]
  %s1 = inlined_call_operand.hbm [shape: f32[128,128], index: 1, kind: input, shape index: {}]
  %s2 = inlined_call_operand.hbm [shape: f32[128,128], index: 2, kind: input, shape index: {}]
  %s3 = inlined_call_operand.vmem [shape: f32[1,128], index: 3, kind: input, shape index: {}]
  %s4 = inlined_call_operand.hbm [shape: f32[128,128], index: 4, kind: input, shape index: {}]
  %s5 = inlined_call_operand.vmem [shape: f32[1,128], index: 5, kind: input, shape index: {}]
  %s6 = inlined_call_operand.hbm [shape: f32[8,128], index: 6, kind: output, shape index: {}]
  %s7 = sld [smem:[#allocation0]]
  $region58: #{tpu_custom_call.1} parent=0
    _
  %s9 = ssub.s32 1, %s7
  %s10 = scalar_select 0, %s9, %s7
  $region1: #{tpu_custom_call.1} parent=0
    #allocation3 [shape = 'u8[4096]{0}', space=vmem, size = 0x1000, scoped, tag = 'input window, operand 0, single buffered']
    #allocation4 [shape = 's32[1]{0}', space=sflag, size = 0x4, scoped, tag = 'scoped memory for tpu_custom_call.1']
    #allocation5 [shape = 's32[1]{0}', space=sflag, size = 0x4, scoped, tag = 'scoped memory for tpu_custom_call.1']
    #allocation6 [shape = 'u8[65536]{0}', space=vmem, size = 0x10000, scoped, tag = 'input window, operand 1, single buffered']
    #allocation7 [shape = 's32[1]{0}', space=sflag, size = 0x4, scoped, tag = 'scoped memory for tpu_custom_call.1']
    #allocation8 [shape = 'u8[65536]{0}', space=vmem, size = 0x10000, scoped, tag = 'input window, operand 2, single buffered']
    #allocation9 [shape = 'u8[65536]{0}', space=vmem, size = 0x10000, scoped, tag = 'input window, operand 4, single buffered']
    #allocation10 [shape = 's32[1]{0}', space=sflag, size = 0x4, scoped, tag = 'scoped memory for tpu_custom_call.1']
    #allocation11 [shape = 'u8[4096]{0}', space=vmem, size = 0x1000, scoped, tag = 'output window, operand 0, single buffered']
    %11 = vsyncpa [#allocation4], 0
    %12 = vsyncpa [#allocation7], 0
    %13 = vsyncpa [#allocation10], 0
    %14 = vsyncpa [#allocation5], 0
    // Predicated region
    $region2: #{tpu_custom_call.1} parent=1 // pred_check
      _
    $region3: #{tpu_custom_call.1} parent=1 // pred_check_branch
      %16 = sbr.rel (0) target = $region5
    $region4: #{tpu_custom_call.1} parent=1 // pred_region
      %s18 = ssub.s32 128, 128
      %19 = vsyncadd [#allocation4], %s18
      %s21 = sshll.u32 [#allocation3], 4
      %s22 = int_to_ptr.vmem [resolvable:$true] %s21
      %24 = dma.hbm_to_vmem [thread:$0]  %s0, 128, %s22, [#allocation4]
    $region5: #{tpu_custom_call.1} parent=1 // pred_fallthru
      _
    // Predicated region
    $region6: #{tpu_custom_call.1} parent=1 // pred_check
      _
    $region7: #{tpu_custom_call.1} parent=1 // pred_check_branch
      %26 = sbr.rel (0) target = $region9
    $region8: #{tpu_custom_call.1} parent=1 // pred_region
      %s28 = ssub.s32 2048, 2048
      %29 = vsyncadd [#allocation7], %s28
      %s30 = sshll.u32 [#allocation6], 4
      %s31 = int_to_ptr.vmem [resolvable:$true] %s30
      %36 = dma.hbm_to_vmem [thread:$0]  %s1, 2048, %s31, [#allocation7], 128, 128, 8
    $region9: #{tpu_custom_call.1} parent=1 // pred_fallthru
      _
    // Predicated region
    $region10: #{tpu_custom_call.1} parent=1 // pred_check
      _
    $region11: #{tpu_custom_call.1} parent=1 // pred_check_branch
      %38 = sbr.rel (0) target = $region13
    $region12: #{tpu_custom_call.1} parent=1 // pred_region
      %s40 = ssub.s32 2048, 2048
      %41 = vsyncadd [#allocation7], %s40
      %s42 = sshll.u32 [#allocation8], 4
      %s43 = int_to_ptr.vmem [resolvable:$true] %s42
      %48 = dma.hbm_to_vmem [thread:$0]  %s2, 2048, %s43, [#allocation7], 128, 128, 8
    $region13: #{tpu_custom_call.1} parent=1 // pred_fallthru
      _
    // Predicated region
    $region14: #{tpu_custom_call.1} parent=1 // pred_check
      _
    $region15: #{tpu_custom_call.1} parent=1 // pred_check_branch
      %50 = sbr.rel (0) target = $region17
    $region16: #{tpu_custom_call.1} parent=1 // pred_region
      _
    $region17: #{tpu_custom_call.1} parent=1 // pred_fallthru
      _
    // Predicated region
    $region18: #{tpu_custom_call.1} parent=1 // pred_check
      _
    $region19: #{tpu_custom_call.1} parent=1 // pred_check_branch
      %52 = sbr.rel (0) target = $region21
    $region20: #{tpu_custom_call.1} parent=1 // pred_region
      %s54 = ssub.s32 2048, 2048
      %55 = vsyncadd [#allocation10], %s54
      %s56 = sshll.u32 [#allocation9], 4
      %s57 = int_to_ptr.vmem [resolvable:$true] %s56
      %62 = dma.hbm_to_vmem [thread:$0]  %s4, 2048, %s57, [#allocation10], 128, 128, 8
    $region21: #{tpu_custom_call.1} parent=1 // pred_fallthru
      _
    // Predicated region
    $region22: #{tpu_custom_call.1} parent=1 // pred_check
      _
    $region23: #{tpu_custom_call.1} parent=1 // pred_check_branch
      %64 = sbr.rel (0) target = $region25
    $region24: #{tpu_custom_call.1} parent=1 // pred_region
      _
    $region25: #{tpu_custom_call.1} parent=1 // pred_fallthru
      _
    // Predicated region
    $region26: #{tpu_custom_call.1} parent=1 // pred_check
      _
    $region27: #{tpu_custom_call.1} parent=1 // pred_check_branch
      %66 = sbr.rel (0) target = $region29
    $region28: #{tpu_custom_call.1} parent=1 // pred_region
      %67 = dma.done [#allocation4], 128
    $region29: #{tpu_custom_call.1} parent=1 // pred_fallthru
      _
    // Predicated region
    $region30: #{tpu_custom_call.1} parent=1 // pred_check
      _
    $region31: #{tpu_custom_call.1} parent=1 // pred_check_branch
      %69 = sbr.rel (0) target = $region33
    $region32: #{tpu_custom_call.1} parent=1 // pred_region
      %70 = dma.done [#allocation7], 2048
    $region33: #{tpu_custom_call.1} parent=1 // pred_fallthru
      _
    // Predicated region
    $region34: #{tpu_custom_call.1} parent=1 // pred_check
      _
    $region35: #{tpu_custom_call.1} parent=1 // pred_check_branch
      %72 = sbr.rel (0) target = $region37
    $region36: #{tpu_custom_call.1} parent=1 // pred_region
      %73 = dma.done [#allocation7], 2048
    $region37: #{tpu_custom_call.1} parent=1 // pred_fallthru
      _
    // Predicated region
    $region38: #{tpu_custom_call.1} parent=1 // pred_check
      _
    $region39: #{tpu_custom_call.1} parent=1 // pred_check_branch
      %75 = sbr.rel (0) target = $region41
    $region40: #{tpu_custom_call.1} parent=1 // pred_region
      %76 = dma.done [#allocation10], 2048
    $region41: #{tpu_custom_call.1} parent=1 // pred_fallthru
      _
    %p77 = scmp.eq.s32.totalorder 0, 0
    // Predicated region
    $region42: #{tpu_custom_call.1} parent=1 // pred_check
      %p78 = pneg %p77
    $region43: #{tpu_custom_call.1} parent=1 // pred_check_branch
      %80 = sbr.rel (%p78) target = $region45
    $region44: #{tpu_custom_call.1} parent=1 // pred_region
      %81 = vst [vmem:[#allocation2] sm:$0xff] 0.0
    $region45: #{tpu_custom_call.1} parent=1 // pred_fallthru
      _
    %v82 = vld [vmem:[#allocation2] sm:$0xff]
    %v83 = vld [vmem:[#allocation3] sm:$0xff]
    %v84 = vld [vmem:[#allocation6] sm:$0xff]
    %v85 = vld [vmem:[#allocation6 + $0x8] sm:$0xff]
    %v86 = vld [vmem:[#allocation6 + $0x10] sm:$0xff]
    %v87 = vld [vmem:[#allocation6 + $0x18] sm:$0xff]
    %v88 = vld [vmem:[#allocation6 + $0x20] sm:$0xff]
    %v89 = vld [vmem:[#allocation6 + $0x28] sm:$0xff]
    %v90 = vld [vmem:[#allocation6 + $0x30] sm:$0xff]
    %v91 = vld [vmem:[#allocation6 + $0x38] sm:$0xff]
    %v92 = vld [vmem:[#allocation6 + $0x40] sm:$0xff]
    %v93 = vld [vmem:[#allocation6 + $0x48] sm:$0xff]
    %v94 = vld [vmem:[#allocation6 + $0x50] sm:$0xff]
    %v95 = vld [vmem:[#allocation6 + $0x58] sm:$0xff]
    %v96 = vld [vmem:[#allocation6 + $0x60] sm:$0xff]
    %v97 = vld [vmem:[#allocation6 + $0x68] sm:$0xff]
    %v98 = vld [vmem:[#allocation6 + $0x70] sm:$0xff]
    %v99 = vld [vmem:[#allocation6 + $0x78] sm:$0xff]
    %100 = vmatprep.subr.mxu0 0.0
    %v101 = vand.u32 %v84, 4294901760
    %102 = vmatpush1.msra.mxu0 %v101
    %103 = vmatprep.subr.mxu0 0.0
    %v104 = vand.u32 %v85, 4294901760
    %105 = vmatpush1.msra.mxu0 %v104
    %106 = vmatprep.subr.mxu0 0.0
    %v107 = vand.u32 %v86, 4294901760
    %108 = vmatpush1.msra.mxu0 %v107
    %109 = vmatprep.subr.mxu0 0.0
    %v110 = vand.u32 %v87, 4294901760
    %111 = vmatpush1.msra.mxu0 %v110
    %112 = vmatprep.subr.mxu0 0.0
    %v113 = vand.u32 %v88, 4294901760
    %114 = vmatpush1.msra.mxu0 %v113
    %115 = vmatprep.subr.mxu0 0.0
    %v116 = vand.u32 %v89, 4294901760
    %117 = vmatpush1.msra.mxu0 %v116
    %118 = vmatprep.subr.mxu0 0.0
    %v119 = vand.u32 %v90, 4294901760
    %120 = vmatpush1.msra.mxu0 %v119
    %121 = vmatprep.subr.mxu0 0.0
    %v122 = vand.u32 %v91, 4294901760
    %123 = vmatpush1.msra.mxu0 %v122
    %124 = vmatprep.subr.mxu0 0.0
    %v125 = vand.u32 %v92, 4294901760
    %126 = vmatpush1.msra.mxu0 %v125
    %127 = vmatprep.subr.mxu0 0.0
    %v128 = vand.u32 %v93, 4294901760
    %129 = vmatpush1.msra.mxu0 %v128
    %130 = vmatprep.subr.mxu0 0.0
    %v131 = vand.u32 %v94, 4294901760
    %132 = vmatpush1.msra.mxu0 %v131
    %133 = vmatprep.subr.mxu0 0.0
    %v134 = vand.u32 %v95, 4294901760
    %135 = vmatpush1.msra.mxu0 %v134
    %136 = vmatprep.subr.mxu0 0.0
    %v137 = vand.u32 %v96, 4294901760
    %138 = vmatpush1.msra.mxu0 %v137
    %139 = vmatprep.subr.mxu0 0.0
    %v140 = vand.u32 %v97, 4294901760
    %141 = vmatpush1.msra.mxu0 %v140
    %142 = vmatprep.subr.mxu0 0.0
    %v143 = vand.u32 %v98, 4294901760
    %144 = vmatpush1.msra.mxu0 %v143
    %145 = vmatprep.subr.mxu0 0.0
    %v146 = vand.u32 %v99, 4294901760
    %147 = vmatpush1.msra.mxu0 %v146
    %148 = vmatprep.subr.mxu0 0.0
    %149 = vmatpush1.msra.mxu0 0.0
    %150 = vmatprep.subr.mxu0 0.0
    %151 = vmatpush1.msra.mxu0 0.0
    %152 = vmatprep.subr.mxu0 0.0
    %153 = vmatpush1.msra.mxu0 0.0
    %154 = vmatprep.subr.mxu0 0.0
    %155 = vmatpush1.msra.mxu0 0.0
    %156 = vmatprep.subr.mxu0 0.0
    %157 = vmatpush1.msra.mxu0 0.0
    %158 = vmatprep.subr.mxu0 0.0
    %159 = vmatpush1.msra.mxu0 0.0
    %160 = vmatprep.subr.mxu0 0.0
    %161 = vmatpush1.msra.mxu0 0.0
    %162 = vmatprep.subr.mxu0 0.0
    %163 = vmatpush1.msra.mxu0 0.0
    %164 = vmatprep.subr.mxu0 0.0
    %165 = vmatpush1.msra.mxu0 0.0
    %166 = vmatprep.subr.mxu0 0.0
    %167 = vmatpush1.msra.mxu0 0.0
    %168 = vmatprep.subr.mxu0 0.0
    %169 = vmatpush1.msra.mxu0 0.0
    %170 = vmatprep.subr.mxu0 0.0
    %171 = vmatpush1.msra.mxu0 0.0
    %172 = vmatprep.subr.mxu0 0.0
    %173 = vmatpush1.msra.mxu0 0.0
    %174 = vmatprep.subr.mxu0 0.0
    %175 = vmatpush1.msra.mxu0 0.0
    %176 = vmatprep.subr.mxu0 0.0
    %177 = vmatpush1.msra.mxu0 0.0
    %178 = vmatprep.subr.mxu0 0.0
    %179 = vmatpush1.msra.mxu0 0.0
    %180 = vmatprep.mubr.f32.mxu0 0.0
    %v181 = vand.u32 %v83, 4294901760
    %v182 = vsub.f32 %v83, %v181
    %v183 = vand.u32 %v182, 4294901760
    %v184 = vsub.f32 %v182, %v183
    %v185 = vand.u32 %v184, 4294901760
    %186 = vmatmul.mubr.f32.gmra.mrb[0].mxu0 %v185
    %v187 = vpop.f32.mrb[0].mxu0
    %v188 = vadd.f32 0.0, %v187
    %v189 = vpop.f32.mrb[0].mxu0
    %190 = vdwg.mxu0
    %191 = vmatprep.subr.mxu0 0.0
    %v192 = vand.u32 %v84, 4294901760
    %v193 = vsub.f32 %v84, %v192
    %v194 = vand.u32 %v193, 4294901760
    %v195 = vsub.f32 %v193, %v194
    %v196 = vand.u32 %v195, 4294901760
    %197 = vmatpush1.msra.mxu0 %v196
    %198 = vmatprep.subr.mxu0 0.0
    %v199 = vand.u32 %v85, 4294901760
    %v200 = vsub.f32 %v85, %v199
    %v201 = vand.u32 %v200, 4294901760
    %v202 = vsub.f32 %v200, %v201
    %v203 = vand.u32 %v202, 4294901760
    %204 = vmatpush1.msra.mxu0 %v203
    %205 = vmatprep.subr.mxu0 0.0
    %v206 = vand.u32 %v86, 4294901760
    %v207 = vsub.f32 %v86, %v206
    %v208 = vand.u32 %v207, 4294901760
    %v209 = vsub.f32 %v207, %v208
    %v210 = vand.u32 %v209, 4294901760
    %211 = vmatpush1.msra.mxu0 %v210
    %212 = vmatprep.subr.mxu0 0.0
    %v213 = vand.u32 %v87, 4294901760
    %v214 = vsub.f32 %v87, %v213
    %v215 = vand.u32 %v214, 4294901760
    %v216 = vsub.f32 %v214, %v215
    %v217 = vand.u32 %v216, 4294901760
    %218 = vmatpush1.msra.mxu0 %v217
    %219 = vmatprep.subr.mxu0 0.0
    %v220 = vand.u32 %v88, 4294901760
    %v221 = vsub.f32 %v88, %v220
    %v222 = vand.u32 %v221, 4294901760
    %v223 = vsub.f32 %v221, %v222
    %v224 = vand.u32 %v223, 4294901760
    %225 = vmatpush1.msra.mxu0 %v224
    %226 = vmatprep.subr.mxu0 0.0
    %v227 = vand.u32 %v89, 4294901760
    %v228 = vsub.f32 %v89, %v227
    %v229 = vand.u32 %v228, 4294901760
    %v230 = vsub.f32 %v228, %v229
    %v231 = vand.u32 %v230, 4294901760
    %232 = vmatpush1.msra.mxu0 %v231
    %233 = vmatprep.subr.mxu0 0.0
    %v234 = vand.u32 %v90, 4294901760
    %v235 = vsub.f32 %v90, %v234
    %v236 = vand.u32 %v235, 4294901760
    %v237 = vsub.f32 %v235, %v236
    %v238 = vand.u32 %v237, 4294901760
    %239 = vmatpush1.msra.mxu0 %v238
    %240 = vmatprep.subr.mxu0 0.0
    %v241 = vand.u32 %v91, 4294901760
    %v242 = vsub.f32 %v91, %v241
    %v243 = vand.u32 %v242, 4294901760
    %v244 = vsub.f32 %v242, %v243
    %v245 = vand.u32 %v244, 4294901760
    %246 = vmatpush1.msra.mxu0 %v245
    %247 = vmatprep.subr.mxu0 0.0
    %v248 = vand.u32 %v92, 4294901760
    %v249 = vsub.f32 %v92, %v248
    %v250 = vand.u32 %v249, 4294901760
    %v251 = vsub.f32 %v249, %v250
    %v252 = vand.u32 %v251, 4294901760
    %253 = vmatpush1.msra.mxu0 %v252
    %254 = vmatprep.subr.mxu0 0.0
    %v255 = vand.u32 %v93, 4294901760
    %v256 = vsub.f32 %v93, %v255
    %v257 = vand.u32 %v256, 4294901760
    %v258 = vsub.f32 %v256, %v257
    %v259 = vand.u32 %v258, 4294901760
    %260 = vmatpush1.msra.mxu0 %v259
    %261 = vmatprep.subr.mxu0 0.0
    %v262 = vand.u32 %v94, 4294901760
    %v263 = vsub.f32 %v94, %v262
    %v264 = vand.u32 %v263, 4294901760
    %v265 = vsub.f32 %v263, %v264
    %v266 = vand.u32 %v265, 4294901760
    %267 = vmatpush1.msra.mxu0 %v266
    %268 = vmatprep.subr.mxu0 0.0
    %v269 = vand.u32 %v95, 4294901760
    %v270 = vsub.f32 %v95, %v269
    %v271 = vand.u32 %v270, 4294901760
    %v272 = vsub.f32 %v270, %v271
    %v273 = vand.u32 %v272, 4294901760
    %274 = vmatpush1.msra.mxu0 %v273
    %275 = vmatprep.subr.mxu0 0.0
    %v276 = vand.u32 %v96, 4294901760
    %v277 = vsub.f32 %v96, %v276
    %v278 = vand.u32 %v277, 4294901760
    %v279 = vsub.f32 %v277, %v278
    %v280 = vand.u32 %v279, 4294901760
    %281 = vmatpush1.msra.mxu0 %v280
    %282 = vmatprep.subr.mxu0 0.0
    %v283 = vand.u32 %v97, 4294901760
    %v284 = vsub.f32 %v97, %v283
    %v285 = vand.u32 %v284, 4294901760
    %v286 = vsub.f32 %v284, %v285
    %v287 = vand.u32 %v286, 4294901760
    %288 = vmatpush1.msra.mxu0 %v287
    %289 = vmatprep.subr.mxu0 0.0
    %v290 = vand.u32 %v98, 4294901760
    %v291 = vsub.f32 %v98, %v290
    %v292 = vand.u32 %v291, 4294901760
    %v293 = vsub.f32 %v291, %v292
    %v294 = vand.u32 %v293, 4294901760
    %295 = vmatpush1.msra.mxu0 %v294
    %296 = vmatprep.subr.mxu0 0.0
    %v297 = vand.u32 %v99, 4294901760
    %v298 = vsub.f32 %v99, %v297
    %v299 = vand.u32 %v298, 4294901760
    %v300 = vsub.f32 %v298, %v299
    %v301 = vand.u32 %v300, 4294901760
    %302 = vmatpush1.msra.mxu0 %v301
    %303 = vmatprep.subr.mxu0 0.0
    %304 = vmatpush1.msra.mxu0 0.0
    %305 = vmatprep.subr.mxu0 0.0
    %306 = vmatpush1.msra.mxu0 0.0
    %307 = vmatprep.subr.mxu0 0.0
    %308 = vmatpush1.msra.mxu0 0.0
    %309 = vmatprep.subr.mxu0 0.0
    %310 = vmatpush1.msra.mxu0 0.0
    %311 = vmatprep.subr.mxu0 0.0
    %312 = vmatpush1.msra.mxu0 0.0
    %313 = vmatprep.subr.mxu0 0.0
    %314 = vmatpush1.msra.mxu0 0.0
    %315 = vmatprep.subr.mxu0 0.0
    %316 = vmatpush1.msra.mxu0 0.0
    %317 = vmatprep.subr.mxu0 0.0
    %318 = vmatpush1.msra.mxu0 0.0
    %319 = vmatprep.subr.mxu0 0.0
    %320 = vmatpush1.msra.mxu0 0.0
    %321 = vmatprep.subr.mxu0 0.0
    %322 = vmatpush1.msra.mxu0 0.0
    %323 = vmatprep.subr.mxu0 0.0
    %324 = vmatpush1.msra.mxu0 0.0
    %325 = vmatprep.subr.mxu0 0.0
    %326 = vmatpush1.msra.mxu0 0.0
    %327 = vmatprep.subr.mxu0 0.0
    %328 = vmatpush1.msra.mxu0 0.0
    %329 = vmatprep.subr.mxu0 0.0
    %330 = vmatpush1.msra.mxu0 0.0
    %331 = vmatprep.subr.mxu0 0.0
    %332 = vmatpush1.msra.mxu0 0.0
    %333 = vmatprep.subr.mxu0 0.0
    %334 = vmatpush1.msra.mxu0 0.0
    %335 = vmatprep.mubr.f32.mxu0 0.0
    %v336 = vand.u32 %v83, 4294901760
    %337 = vmatmul.mubr.f32.gmra.mrb[0].mxu0 %v336
    %v338 = vpop.f32.mrb[0].mxu0
    %v339 = vadd.f32 %v188, %v338
    %v340 = vpop.f32.mrb[0].mxu0
    %341 = vdwg.mxu0
    %342 = vmatprep.subr.mxu0 0.0
    %v343 = vand.u32 %v84, 4294901760
    %v344 = vsub.f32 %v84, %v343
    %345 = vmatpush1.msra.mxu0 %v344
    %346 = vmatprep.subr.mxu0 0.0
    %v347 = vand.u32 %v85, 4294901760
    %v348 = vsub.f32 %v85, %v347
    %349 = vmatpush1.msra.mxu0 %v348
    %350 = vmatprep.subr.mxu0 0.0
    %v351 = vand.u32 %v86, 4294901760
    %v352 = vsub.f32 %v86, %v351
    %353 = vmatpush1.msra.mxu0 %v352
    %354 = vmatprep.subr.mxu0 0.0
    %v355 = vand.u32 %v87, 4294901760
    %v356 = vsub.f32 %v87, %v355
    %357 = vmatpush1.msra.mxu0 %v356
    %358 = vmatprep.subr.mxu0 0.0
    %v359 = vand.u32 %v88, 4294901760
    %v360 = vsub.f32 %v88, %v359
    %361 = vmatpush1.msra.mxu0 %v360
    %362 = vmatprep.subr.mxu0 0.0
    %v363 = vand.u32 %v89, 4294901760
    %v364 = vsub.f32 %v89, %v363
    %365 = vmatpush1.msra.mxu0 %v364
    %366 = vmatprep.subr.mxu0 0.0
    %v367 = vand.u32 %v90, 4294901760
    %v368 = vsub.f32 %v90, %v367
    %369 = vmatpush1.msra.mxu0 %v368
    %370 = vmatprep.subr.mxu0 0.0
    %v371 = vand.u32 %v91, 4294901760
    %v372 = vsub.f32 %v91, %v371
    %373 = vmatpush1.msra.mxu0 %v372
    %374 = vmatprep.subr.mxu0 0.0
    %v375 = vand.u32 %v92, 4294901760
    %v376 = vsub.f32 %v92, %v375
    %377 = vmatpush1.msra.mxu0 %v376
    %378 = vmatprep.subr.mxu0 0.0
    %v379 = vand.u32 %v93, 4294901760
    %v380 = vsub.f32 %v93, %v379
    %381 = vmatpush1.msra.mxu0 %v380
    %382 = vmatprep.subr.mxu0 0.0
    %v383 = vand.u32 %v94, 4294901760
    %v384 = vsub.f32 %v94, %v383
    %385 = vmatpush1.msra.mxu0 %v384
    %386 = vmatprep.subr.mxu0 0.0
    %v387 = vand.u32 %v95, 4294901760
    %v388 = vsub.f32 %v95, %v387
    %389 = vmatpush1.msra.mxu0 %v388
    %390 = vmatprep.subr.mxu0 0.0
    %v391 = vand.u32 %v96, 4294901760
    %v392 = vsub.f32 %v96, %v391
    %393 = vmatpush1.msra.mxu0 %v392
    %394 = vmatprep.subr.mxu0 0.0
    %v395 = vand.u32 %v97, 4294901760
    %v396 = vsub.f32 %v97, %v395
    %397 = vmatpush1.msra.mxu0 %v396
    %398 = vmatprep.subr.mxu0 0.0
    %v399 = vand.u32 %v98, 4294901760
    %v400 = vsub.f32 %v98, %v399
    %401 = vmatpush1.msra.mxu0 %v400
    %402 = vmatprep.subr.mxu0 0.0
    %v403 = vand.u32 %v99, 4294901760
    %v404 = vsub.f32 %v99, %v403
    %405 = vmatpush1.msra.mxu0 %v404
    %406 = vmatprep.subr.mxu0 0.0
    %407 = vmatpush1.msra.mxu0 0.0
    %408 = vmatprep.subr.mxu0 0.0
    %409 = vmatpush1.msra.mxu0 0.0
    %410 = vmatprep.subr.mxu0 0.0
    %411 = vmatpush1.msra.mxu0 0.0
    %412 = vmatprep.subr.mxu0 0.0
    %413 = vmatpush1.msra.mxu0 0.0
    %414 = vmatprep.subr.mxu0 0.0
    %415 = vmatpush1.msra.mxu0 0.0
    %416 = vmatprep.subr.mxu0 0.0
    %417 = vmatpush1.msra.mxu0 0.0
    %418 = vmatprep.subr.mxu0 0.0
    %419 = vmatpush1.msra.mxu0 0.0
    %420 = vmatprep.subr.mxu0 0.0
    %421 = vmatpush1.msra.mxu0 0.0
    %422 = vmatprep.subr.mxu0 0.0
    %423 = vmatpush1.msra.mxu0 0.0
    %424 = vmatprep.subr.mxu0 0.0
    %425 = vmatpush1.msra.mxu0 0.0
    %426 = vmatprep.subr.mxu0 0.0
    %427 = vmatpush1.msra.mxu0 0.0
    %428 = vmatprep.subr.mxu0 0.0
    %429 = vmatpush1.msra.mxu0 0.0
    %430 = vmatprep.subr.mxu0 0.0
    %431 = vmatpush1.msra.mxu0 0.0
    %432 = vmatprep.subr.mxu0 0.0
    %433 = vmatpush1.msra.mxu0 0.0
    %434 = vmatprep.subr.mxu0 0.0
    %435 = vmatpush1.msra.mxu0 0.0
    %436 = vmatprep.subr.mxu0 0.0
    %437 = vmatpush1.msra.mxu0 0.0
    %438 = vmatprep.mubr.f32.mxu0 0.0
    %v439 = vand.u32 %v83, 4294901760
    %v440 = vsub.f32 %v83, %v439
    %441 = vmatmul.mubr.f32.gmra.mrb[0].mxu0 %v440
    %v442 = vpop.f32.mrb[0].mxu0
    %v443 = vadd.f32 %v339, %v442
    %v444 = vpop.f32.mrb[0].mxu0
    %445 = vdwg.mxu0
    %446 = vmatprep.subr.mxu0 0.0
    %v447 = vand.u32 %v84, 4294901760
    %448 = vmatpush1.msra.mxu0 %v447
    %449 = vmatprep.subr.mxu0 0.0
    %v450 = vand.u32 %v85, 4294901760
    %451 = vmatpush1.msra.mxu0 %v450
    %452 = vmatprep.subr.mxu0 0.0
    %v453 = vand.u32 %v86, 4294901760
    %454 = vmatpush1.msra.mxu0 %v453
    %455 = vmatprep.subr.mxu0 0.0
    %v456 = vand.u32 %v87, 4294901760
    %457 = vmatpush1.msra.mxu0 %v456
    %458 = vmatprep.subr.mxu0 0.0
    %v459 = vand.u32 %v88, 4294901760
    %460 = vmatpush1.msra.mxu0 %v459
    %461 = vmatprep.subr.mxu0 0.0
    %v462 = vand.u32 %v89, 4294901760
    %463 = vmatpush1.msra.mxu0 %v462
    %464 = vmatprep.subr.mxu0 0.0
    %v465 = vand.u32 %v90, 4294901760
    %466 = vmatpush1.msra.mxu0 %v465
    %467 = vmatprep.subr.mxu0 0.0
    %v468 = vand.u32 %v91, 4294901760
    %469 = vmatpush1.msra.mxu0 %v468
    %470 = vmatprep.subr.mxu0 0.0
    %v471 = vand.u32 %v92, 4294901760
    %472 = vmatpush1.msra.mxu0 %v471
    %473 = vmatprep.subr.mxu0 0.0
    %v474 = vand.u32 %v93, 4294901760
    %475 = vmatpush1.msra.mxu0 %v474
    %476 = vmatprep.subr.mxu0 0.0
    %v477 = vand.u32 %v94, 4294901760
    %478 = vmatpush1.msra.mxu0 %v477
    %479 = vmatprep.subr.mxu0 0.0
    %v480 = vand.u32 %v95, 4294901760
    %481 = vmatpush1.msra.mxu0 %v480
    %482 = vmatprep.subr.mxu0 0.0
    %v483 = vand.u32 %v96, 4294901760
    %484 = vmatpush1.msra.mxu0 %v483
    %485 = vmatprep.subr.mxu0 0.0
    %v486 = vand.u32 %v97, 4294901760
    %487 = vmatpush1.msra.mxu0 %v486
    %488 = vmatprep.subr.mxu0 0.0
    %v489 = vand.u32 %v98, 4294901760
    %490 = vmatpush1.msra.mxu0 %v489
    %491 = vmatprep.subr.mxu0 0.0
    %v492 = vand.u32 %v99, 4294901760
    %493 = vmatpush1.msra.mxu0 %v492
    %494 = vmatprep.subr.mxu0 0.0
    %495 = vmatpush1.msra.mxu0 0.0
    %496 = vmatprep.subr.mxu0 0.0
    %497 = vmatpush1.msra.mxu0 0.0
    %498 = vmatprep.subr.mxu0 0.0
    %499 = vmatpush1.msra.mxu0 0.0
    %500 = vmatprep.subr.mxu0 0.0
    %501 = vmatpush1.msra.mxu0 0.0
    %502 = vmatprep.subr.mxu0 0.0
    %503 = vmatpush1.msra.mxu0 0.0
    %504 = vmatprep.subr.mxu0 0.0
    %505 = vmatpush1.msra.mxu0 0.0
    %506 = vmatprep.subr.mxu0 0.0
    %507 = vmatpush1.msra.mxu0 0.0
    %508 = vmatprep.subr.mxu0 0.0
    %509 = vmatpush1.msra.mxu0 0.0
    %510 = vmatprep.subr.mxu0 0.0
    %511 = vmatpush1.msra.mxu0 0.0
    %512 = vmatprep.subr.mxu0 0.0
    %513 = vmatpush1.msra.mxu0 0.0
    %514 = vmatprep.subr.mxu0 0.0
    %515 = vmatpush1.msra.mxu0 0.0
    %516 = vmatprep.subr.mxu0 0.0
    %517 = vmatpush1.msra.mxu0 0.0
    %518 = vmatprep.subr.mxu0 0.0
    %519 = vmatpush1.msra.mxu0 0.0
    %520 = vmatprep.subr.mxu0 0.0
    %521 = vmatpush1.msra.mxu0 0.0
    %522 = vmatprep.subr.mxu0 0.0
    %523 = vmatpush1.msra.mxu0 0.0
    %524 = vmatprep.subr.mxu0 0.0
    %525 = vmatpush1.msra.mxu0 0.0
    %526 = vmatprep.mubr.f32.mxu0 0.0
    %v527 = vand.u32 %v83, 4294901760
    %v528 = vsub.f32 %v83, %v527
    %v529 = vand.u32 %v528, 4294901760
    %530 = vmatmul.mubr.f32.gmra.mrb[0].mxu0 %v529
    %v531 = vpop.f32.mrb[0].mxu0
    %v532 = vadd.f32 %v443, %v531
    %v533 = vpop.f32.mrb[0].mxu0
    %534 = vdwg.mxu0
    %535 = vmatprep.subr.mxu0 0.0
    %v536 = vand.u32 %v84, 4294901760
    %v537 = vsub.f32 %v84, %v536
    %v538 = vand.u32 %v537, 4294901760
    %539 = vmatpush1.msra.mxu0 %v538
    %540 = vmatprep.subr.mxu0 0.0
    %v541 = vand.u32 %v85, 4294901760
    %v542 = vsub.f32 %v85, %v541
    %v543 = vand.u32 %v542, 4294901760
    %544 = vmatpush1.msra.mxu0 %v543
    %545 = vmatprep.subr.mxu0 0.0
    %v546 = vand.u32 %v86, 4294901760
    %v547 = vsub.f32 %v86, %v546
    %v548 = vand.u32 %v547, 4294901760
    %549 = vmatpush1.msra.mxu0 %v548
    %550 = vmatprep.subr.mxu0 0.0
    %v551 = vand.u32 %v87, 4294901760
    %v552 = vsub.f32 %v87, %v551
    %v553 = vand.u32 %v552, 4294901760
    %554 = vmatpush1.msra.mxu0 %v553
    %555 = vmatprep.subr.mxu0 0.0
    %v556 = vand.u32 %v88, 4294901760
    %v557 = vsub.f32 %v88, %v556
    %v558 = vand.u32 %v557, 4294901760
    %559 = vmatpush1.msra.mxu0 %v558
    %560 = vmatprep.subr.mxu0 0.0
    %v561 = vand.u32 %v89, 4294901760
    %v562 = vsub.f32 %v89, %v561
    %v563 = vand.u32 %v562, 4294901760
    %564 = vmatpush1.msra.mxu0 %v563
    %565 = vmatprep.subr.mxu0 0.0
    %v566 = vand.u32 %v90, 4294901760
    %v567 = vsub.f32 %v90, %v566
    %v568 = vand.u32 %v567, 4294901760
    %569 = vmatpush1.msra.mxu0 %v568
    %570 = vmatprep.subr.mxu0 0.0
    %v571 = vand.u32 %v91, 4294901760
    %v572 = vsub.f32 %v91, %v571
    %v573 = vand.u32 %v572, 4294901760
    %574 = vmatpush1.msra.mxu0 %v573
    %575 = vmatprep.subr.mxu0 0.0
    %v576 = vand.u32 %v92, 4294901760
    %v577 = vsub.f32 %v92, %v576
    %v578 = vand.u32 %v577, 4294901760
    %579 = vmatpush1.msra.mxu0 %v578
    %580 = vmatprep.subr.mxu0 0.0
    %v581 = vand.u32 %v93, 4294901760
    %v582 = vsub.f32 %v93, %v581
    %v583 = vand.u32 %v582, 4294901760
    %584 = vmatpush1.msra.mxu0 %v583
    %585 = vmatprep.subr.mxu0 0.0
    %v586 = vand.u32 %v94, 4294901760
    %v587 = vsub.f32 %v94, %v586
    %v588 = vand.u32 %v587, 4294901760
    %589 = vmatpush1.msra.mxu0 %v588
    %590 = vmatprep.subr.mxu0 0.0
    %v591 = vand.u32 %v95, 4294901760
    %v592 = vsub.f32 %v95, %v591
    %v593 = vand.u32 %v592, 4294901760
    %594 = vmatpush1.msra.mxu0 %v593
    %595 = vmatprep.subr.mxu0 0.0
    %v596 = vand.u32 %v96, 4294901760
    %v597 = vsub.f32 %v96, %v596
    %v598 = vand.u32 %v597, 4294901760
    %599 = vmatpush1.msra.mxu0 %v598
    %600 = vmatprep.subr.mxu0 0.0
    %v601 = vand.u32 %v97, 4294901760
    %v602 = vsub.f32 %v97, %v601
    %v603 = vand.u32 %v602, 4294901760
    %604 = vmatpush1.msra.mxu0 %v603
    %605 = vmatprep.subr.mxu0 0.0
    %v606 = vand.u32 %v98, 4294901760
    %v607 = vsub.f32 %v98, %v606
    %v608 = vand.u32 %v607, 4294901760
    %609 = vmatpush1.msra.mxu0 %v608
    %610 = vmatprep.subr.mxu0 0.0
    %v611 = vand.u32 %v99, 4294901760
    %v612 = vsub.f32 %v99, %v611
    %v613 = vand.u32 %v612, 4294901760
    %614 = vmatpush1.msra.mxu0 %v613
    %615 = vmatprep.subr.mxu0 0.0
    %616 = vmatpush1.msra.mxu0 0.0
    %617 = vmatprep.subr.mxu0 0.0
    %618 = vmatpush1.msra.mxu0 0.0
    %619 = vmatprep.subr.mxu0 0.0
    %620 = vmatpush1.msra.mxu0 0.0
    %621 = vmatprep.subr.mxu0 0.0
    %622 = vmatpush1.msra.mxu0 0.0
    %623 = vmatprep.subr.mxu0 0.0
    %624 = vmatpush1.msra.mxu0 0.0
    %625 = vmatprep.subr.mxu0 0.0
    %626 = vmatpush1.msra.mxu0 0.0
    %627 = vmatprep.subr.mxu0 0.0
    %628 = vmatpush1.msra.mxu0 0.0
    %629 = vmatprep.subr.mxu0 0.0
    %630 = vmatpush1.msra.mxu0 0.0
    %631 = vmatprep.subr.mxu0 0.0
    %632 = vmatpush1.msra.mxu0 0.0
    %633 = vmatprep.subr.mxu0 0.0
    %634 = vmatpush1.msra.mxu0 0.0
    %635 = vmatprep.subr.mxu0 0.0
    %636 = vmatpush1.msra.mxu0 0.0
    %637 = vmatprep.subr.mxu0 0.0
    %638 = vmatpush1.msra.mxu0 0.0
    %639 = vmatprep.subr.mxu0 0.0
    %640 = vmatpush1.msra.mxu0 0.0
    %641 = vmatprep.subr.mxu0 0.0
    %642 = vmatpush1.msra.mxu0 0.0
    %643 = vmatprep.subr.mxu0 0.0
    %644 = vmatpush1.msra.mxu0 0.0
    %645 = vmatprep.subr.mxu0 0.0
    %646 = vmatpush1.msra.mxu0 0.0
    %647 = vmatprep.mubr.f32.mxu0 0.0
    %v648 = vand.u32 %v83, 4294901760
    %649 = vmatmul.mubr.f32.gmra.mrb[0].mxu0 %v648
    %v650 = vpop.f32.mrb[0].mxu0
    %v651 = vadd.f32 %v532, %v650
    %v652 = vpop.f32.mrb[0].mxu0
    %653 = vdwg.mxu0
    %654 = vmatprep.subr.mxu0 0.0
    %v655 = vand.u32 %v84, 4294901760
    %656 = vmatpush1.msra.mxu0 %v655
    %657 = vmatprep.subr.mxu0 0.0
    %v658 = vand.u32 %v85, 4294901760
    %659 = vmatpush1.msra.mxu0 %v658
    %660 = vmatprep.subr.mxu0 0.0
    %v661 = vand.u32 %v86, 4294901760
    %662 = vmatpush1.msra.mxu0 %v661
    %663 = vmatprep.subr.mxu0 0.0
    %v664 = vand.u32 %v87, 4294901760
    %665 = vmatpush1.msra.mxu0 %v664
    %666 = vmatprep.subr.mxu0 0.0
    %v667 = vand.u32 %v88, 4294901760
    %668 = vmatpush1.msra.mxu0 %v667
    %669 = vmatprep.subr.mxu0 0.0
    %v670 = vand.u32 %v89, 4294901760
    %671 = vmatpush1.msra.mxu0 %v670
    %672 = vmatprep.subr.mxu0 0.0
    %v673 = vand.u32 %v90, 4294901760
    %674 = vmatpush1.msra.mxu0 %v673
    %675 = vmatprep.subr.mxu0 0.0
    %v676 = vand.u32 %v91, 4294901760
    %677 = vmatpush1.msra.mxu0 %v676
    %678 = vmatprep.subr.mxu0 0.0
    %v679 = vand.u32 %v92, 4294901760
    %680 = vmatpush1.msra.mxu0 %v679
    %681 = vmatprep.subr.mxu0 0.0
    %v682 = vand.u32 %v93, 4294901760
    %683 = vmatpush1.msra.mxu0 %v682
    %684 = vmatprep.subr.mxu0 0.0
    %v685 = vand.u32 %v94, 4294901760
    %686 = vmatpush1.msra.mxu0 %v685
    %687 = vmatprep.subr.mxu0 0.0
    %v688 = vand.u32 %v95, 4294901760
    %689 = vmatpush1.msra.mxu0 %v688
    %690 = vmatprep.subr.mxu0 0.0
    %v691 = vand.u32 %v96, 4294901760
    %692 = vmatpush1.msra.mxu0 %v691
    %693 = vmatprep.subr.mxu0 0.0
    %v694 = vand.u32 %v97, 4294901760
    %695 = vmatpush1.msra.mxu0 %v694
    %696 = vmatprep.subr.mxu0 0.0
    %v697 = vand.u32 %v98, 4294901760
    %698 = vmatpush1.msra.mxu0 %v697
    %699 = vmatprep.subr.mxu0 0.0
    %v700 = vand.u32 %v99, 4294901760
    %701 = vmatpush1.msra.mxu0 %v700
    %702 = vmatprep.subr.mxu0 0.0
    %703 = vmatpush1.msra.mxu0 0.0
    %704 = vmatprep.subr.mxu0 0.0
    %705 = vmatpush1.msra.mxu0 0.0
    %706 = vmatprep.subr.mxu0 0.0
    %707 = vmatpush1.msra.mxu0 0.0
    %708 = vmatprep.subr.mxu0 0.0
    %709 = vmatpush1.msra.mxu0 0.0
    %710 = vmatprep.subr.mxu0 0.0
    %711 = vmatpush1.msra.mxu0 0.0
    %712 = vmatprep.subr.mxu0 0.0
    %713 = vmatpush1.msra.mxu0 0.0
    %714 = vmatprep.subr.mxu0 0.0
    %715 = vmatpush1.msra.mxu0 0.0
    %716 = vmatprep.subr.mxu0 0.0
    %717 = vmatpush1.msra.mxu0 0.0
    %718 = vmatprep.subr.mxu0 0.0
    %719 = vmatpush1.msra.mxu0 0.0
    %720 = vmatprep.subr.mxu0 0.0
    %721 = vmatpush1.msra.mxu0 0.0
    %722 = vmatprep.subr.mxu0 0.0
    %723 = vmatpush1.msra.mxu0 0.0
    %724 = vmatprep.subr.mxu0 0.0
    %725 = vmatpush1.msra.mxu0 0.0
    %726 = vmatprep.subr.mxu0 0.0
    %727 = vmatpush1.msra.mxu0 0.0
    %728 = vmatprep.subr.mxu0 0.0
    %729 = vmatpush1.msra.mxu0 0.0
    %730 = vmatprep.subr.mxu0 0.0
    %731 = vmatpush1.msra.mxu0 0.0
    %732 = vmatprep.subr.mxu0 0.0
    %733 = vmatpush1.msra.mxu0 0.0
    %734 = vmatprep.mubr.f32.mxu0 0.0
    %v735 = vand.u32 %v83, 4294901760
    %736 = vmatmul.mubr.f32.gmra.mrb[0].mxu0 %v735
    %v737 = vpop.f32.mrb[0].mxu0
    %v738 = vadd.f32 %v651, %v737
    %v739 = vpop.f32.mrb[0].mxu0
    %740 = vdwg.mxu0
    %v741 = vadd.f32 %v82, %v738
    %742 = vst [vmem:[#allocation2] sm:$0xff] %v741
    // Predicated region
    $region46: #{tpu_custom_call.1} parent=1 // pred_check
      %p743 = pneg %p77
    $region47: #{tpu_custom_call.1} parent=1 // pred_check_branch
      %745 = sbr.rel (%p743) target = $region49
    $region48: #{tpu_custom_call.1} parent=1 // pred_region
      %v746 = vld [vmem:[#allocation2] sm:$0xff]
      %v747 = vld [vmem:[#allocation8] sm:$0xff]
      %v748 = vld [vmem:[#allocation8 + $0x8] sm:$0xff]
      %v749 = vld [vmem:[#allocation8 + $0x10] sm:$0xff]
      %v750 = vld [vmem:[#allocation8 + $0x18] sm:$0xff]
      %v751 = vld [vmem:[#allocation8 + $0x20] sm:$0xff]
      %v752 = vld [vmem:[#allocation8 + $0x28] sm:$0xff]
      %v753 = vld [vmem:[#allocation8 + $0x30] sm:$0xff]
      %v754 = vld [vmem:[#allocation8 + $0x38] sm:$0xff]
      %v755 = vld [vmem:[#allocation8 + $0x40] sm:$0xff]
      %v756 = vld [vmem:[#allocation8 + $0x48] sm:$0xff]
      %v757 = vld [vmem:[#allocation8 + $0x50] sm:$0xff]
      %v758 = vld [vmem:[#allocation8 + $0x58] sm:$0xff]
      %v759 = vld [vmem:[#allocation8 + $0x60] sm:$0xff]
      %v760 = vld [vmem:[#allocation8 + $0x68] sm:$0xff]
      %v761 = vld [vmem:[#allocation8 + $0x70] sm:$0xff]
      %v762 = vld [vmem:[#allocation8 + $0x78] sm:$0xff]
      %v763 = vld [vmem:[%s3] sm:$0x1]
      %v765 = vlaneseq
      %v766 = vshrl.u32 %v765, 7
      %v767 = vsub.s32 0, %v766
      %v768 = vrot.slane %v763, %v767
      %770 = vmatprep.subr.mxu0 0.0
      %v771 = vand.u32 %v747, 4294901760
      %772 = vmatpush1.msra.mxu0 %v771
      %773 = vmatprep.subr.mxu0 0.0
      %v774 = vand.u32 %v748, 4294901760
      %775 = vmatpush1.msra.mxu0 %v774
      %776 = vmatprep.subr.mxu0 0.0
      %v777 = vand.u32 %v749, 4294901760
      %778 = vmatpush1.msra.mxu0 %v777
      %779 = vmatprep.subr.mxu0 0.0
      %v780 = vand.u32 %v750, 4294901760
      %781 = vmatpush1.msra.mxu0 %v780
      %782 = vmatprep.subr.mxu0 0.0
      %v783 = vand.u32 %v751, 4294901760
      %784 = vmatpush1.msra.mxu0 %v783
      %785 = vmatprep.subr.mxu0 0.0
      %v786 = vand.u32 %v752, 4294901760
      %787 = vmatpush1.msra.mxu0 %v786
      %788 = vmatprep.subr.mxu0 0.0
      %v789 = vand.u32 %v753, 4294901760
      %790 = vmatpush1.msra.mxu0 %v789
      %791 = vmatprep.subr.mxu0 0.0
      %v792 = vand.u32 %v754, 4294901760
      %793 = vmatpush1.msra.mxu0 %v792
      %794 = vmatprep.subr.mxu0 0.0
      %v795 = vand.u32 %v755, 4294901760
      %796 = vmatpush1.msra.mxu0 %v795
      %797 = vmatprep.subr.mxu0 0.0
      %v798 = vand.u32 %v756, 4294901760
      %799 = vmatpush1.msra.mxu0 %v798
      %800 = vmatprep.subr.mxu0 0.0
      %v801 = vand.u32 %v757, 4294901760
      %802 = vmatpush1.msra.mxu0 %v801
      %803 = vmatprep.subr.mxu0 0.0
      %v804 = vand.u32 %v758, 4294901760
      %805 = vmatpush1.msra.mxu0 %v804
      %806 = vmatprep.subr.mxu0 0.0
      %v807 = vand.u32 %v759, 4294901760
      %808 = vmatpush1.msra.mxu0 %v807
      %809 = vmatprep.subr.mxu0 0.0
      %v810 = vand.u32 %v760, 4294901760
      %811 = vmatpush1.msra.mxu0 %v810
      %812 = vmatprep.subr.mxu0 0.0
      %v813 = vand.u32 %v761, 4294901760
      %814 = vmatpush1.msra.mxu0 %v813
      %815 = vmatprep.subr.mxu0 0.0
      %v816 = vand.u32 %v762, 4294901760
      %817 = vmatpush1.msra.mxu0 %v816
      %818 = vmatprep.subr.mxu0 0.0
      %819 = vmatpush1.msra.mxu0 0.0
      %820 = vmatprep.subr.mxu0 0.0
      %821 = vmatpush1.msra.mxu0 0.0
      %822 = vmatprep.subr.mxu0 0.0
      %823 = vmatpush1.msra.mxu0 0.0
      %824 = vmatprep.subr.mxu0 0.0
      %825 = vmatpush1.msra.mxu0 0.0
      %826 = vmatprep.subr.mxu0 0.0
      %827 = vmatpush1.msra.mxu0 0.0
      %828 = vmatprep.subr.mxu0 0.0
      %829 = vmatpush1.msra.mxu0 0.0
      %830 = vmatprep.subr.mxu0 0.0
      %831 = vmatpush1.msra.mxu0 0.0
      %832 = vmatprep.subr.mxu0 0.0
      %833 = vmatpush1.msra.mxu0 0.0
      %834 = vmatprep.subr.mxu0 0.0
      %835 = vmatpush1.msra.mxu0 0.0
      %836 = vmatprep.subr.mxu0 0.0
      %837 = vmatpush1.msra.mxu0 0.0
      %838 = vmatprep.subr.mxu0 0.0
      %839 = vmatpush1.msra.mxu0 0.0
      %840 = vmatprep.subr.mxu0 0.0
      %841 = vmatpush1.msra.mxu0 0.0
      %842 = vmatprep.subr.mxu0 0.0
      %843 = vmatpush1.msra.mxu0 0.0
      %844 = vmatprep.subr.mxu0 0.0
      %845 = vmatpush1.msra.mxu0 0.0
      %846 = vmatprep.subr.mxu0 0.0
      %847 = vmatpush1.msra.mxu0 0.0
      %848 = vmatprep.subr.mxu0 0.0
      %849 = vmatpush1.msra.mxu0 0.0
      %850 = vmatprep.mubr.f32.mxu0 0.0
      %v851 = vand.u32 %v746, 4294901760
      %v852 = vsub.f32 %v746, %v851
      %v853 = vand.u32 %v852, 4294901760
      %v854 = vsub.f32 %v852, %v853
      %v855 = vand.u32 %v854, 4294901760
      %856 = vmatmul.mubr.f32.gmra.mrb[0].mxu0 %v855
      %v857 = vpop.f32.mrb[0].mxu0
      %v858 = vadd.f32 %v768, %v857
      %v859 = vpop.f32.mrb[0].mxu0
      %860 = vdwg.mxu0
      %861 = vmatprep.subr.mxu0 0.0
      %v862 = vand.u32 %v747, 4294901760
      %v863 = vsub.f32 %v747, %v862
      %v864 = vand.u32 %v863, 4294901760
      %v865 = vsub.f32 %v863, %v864
      %v866 = vand.u32 %v865, 4294901760
      %867 = vmatpush1.msra.mxu0 %v866
      %868 = vmatprep.subr.mxu0 0.0
      %v869 = vand.u32 %v748, 4294901760
      %v870 = vsub.f32 %v748, %v869
      %v871 = vand.u32 %v870, 4294901760
      %v872 = vsub.f32 %v870, %v871
      %v873 = vand.u32 %v872, 4294901760
      %874 = vmatpush1.msra.mxu0 %v873
      %875 = vmatprep.subr.mxu0 0.0
      %v876 = vand.u32 %v749, 4294901760
      %v877 = vsub.f32 %v749, %v876
      %v878 = vand.u32 %v877, 4294901760
      %v879 = vsub.f32 %v877, %v878
      %v880 = vand.u32 %v879, 4294901760
      %881 = vmatpush1.msra.mxu0 %v880
      %882 = vmatprep.subr.mxu0 0.0
      %v883 = vand.u32 %v750, 4294901760
      %v884 = vsub.f32 %v750, %v883
      %v885 = vand.u32 %v884, 4294901760
      %v886 = vsub.f32 %v884, %v885
      %v887 = vand.u32 %v886, 4294901760
      %888 = vmatpush1.msra.mxu0 %v887
      %889 = vmatprep.subr.mxu0 0.0
      %v890 = vand.u32 %v751, 4294901760
      %v891 = vsub.f32 %v751, %v890
      %v892 = vand.u32 %v891, 4294901760
      %v893 = vsub.f32 %v891, %v892
      %v894 = vand.u32 %v893, 4294901760
      %895 = vmatpush1.msra.mxu0 %v894
      %896 = vmatprep.subr.mxu0 0.0
      %v897 = vand.u32 %v752, 4294901760
      %v898 = vsub.f32 %v752, %v897
      %v899 = vand.u32 %v898, 4294901760
      %v900 = vsub.f32 %v898, %v899
      %v901 = vand.u32 %v900, 4294901760
      %902 = vmatpush1.msra.mxu0 %v901
      %903 = vmatprep.subr.mxu0 0.0
      %v904 = vand.u32 %v753, 4294901760
      %v905 = vsub.f32 %v753, %v904
      %v906 = vand.u32 %v905, 4294901760
      %v907 = vsub.f32 %v905, %v906
      %v908 = vand.u32 %v907, 4294901760
      %909 = vmatpush1.msra.mxu0 %v908
      %910 = vmatprep.subr.mxu0 0.0
      %v911 = vand.u32 %v754, 4294901760
      %v912 = vsub.f32 %v754, %v911
      %v913 = vand.u32 %v912, 4294901760
      %v914 = vsub.f32 %v912, %v913
      %v915 = vand.u32 %v914, 4294901760
      %916 = vmatpush1.msra.mxu0 %v915
      %917 = vmatprep.subr.mxu0 0.0
      %v918 = vand.u32 %v755, 4294901760
      %v919 = vsub.f32 %v755, %v918
      %v920 = vand.u32 %v919, 4294901760
      %v921 = vsub.f32 %v919, %v920
      %v922 = vand.u32 %v921, 4294901760
      %923 = vmatpush1.msra.mxu0 %v922
      %924 = vmatprep.subr.mxu0 0.0
      %v925 = vand.u32 %v756, 4294901760
      %v926 = vsub.f32 %v756, %v925
      %v927 = vand.u32 %v926, 4294901760
      %v928 = vsub.f32 %v926, %v927
      %v929 = vand.u32 %v928, 4294901760
      %930 = vmatpush1.msra.mxu0 %v929
      %931 = vmatprep.subr.mxu0 0.0
      %v932 = vand.u32 %v757, 4294901760
      %v933 = vsub.f32 %v757, %v932
      %v934 = vand.u32 %v933, 4294901760
      %v935 = vsub.f32 %v933, %v934
      %v936 = vand.u32 %v935, 4294901760
      %937 = vmatpush1.msra.mxu0 %v936
      %938 = vmatprep.subr.mxu0 0.0
      %v939 = vand.u32 %v758, 4294901760
      %v940 = vsub.f32 %v758, %v939
      %v941 = vand.u32 %v940, 4294901760
      %v942 = vsub.f32 %v940, %v941
      %v943 = vand.u32 %v942, 4294901760
      %944 = vmatpush1.msra.mxu0 %v943
      %945 = vmatprep.subr.mxu0 0.0
      %v946 = vand.u32 %v759, 4294901760
      %v947 = vsub.f32 %v759, %v946
      %v948 = vand.u32 %v947, 4294901760
      %v949 = vsub.f32 %v947, %v948
      %v950 = vand.u32 %v949, 4294901760
      %951 = vmatpush1.msra.mxu0 %v950
      %952 = vmatprep.subr.mxu0 0.0
      %v953 = vand.u32 %v760, 4294901760
      %v954 = vsub.f32 %v760, %v953
      %v955 = vand.u32 %v954, 4294901760
      %v956 = vsub.f32 %v954, %v955
      %v957 = vand.u32 %v956, 4294901760
      %958 = vmatpush1.msra.mxu0 %v957
      %959 = vmatprep.subr.mxu0 0.0
      %v960 = vand.u32 %v761, 4294901760
      %v961 = vsub.f32 %v761, %v960
      %v962 = vand.u32 %v961, 4294901760
      %v963 = vsub.f32 %v961, %v962
      %v964 = vand.u32 %v963, 4294901760
      %965 = vmatpush1.msra.mxu0 %v964
      %966 = vmatprep.subr.mxu0 0.0
      %v967 = vand.u32 %v762, 4294901760
      %v968 = vsub.f32 %v762, %v967
      %v969 = vand.u32 %v968, 4294901760
      %v970 = vsub.f32 %v968, %v969
      %v971 = vand.u32 %v970, 4294901760
      %972 = vmatpush1.msra.mxu0 %v971
      %973 = vmatprep.subr.mxu0 0.0
      %974 = vmatpush1.msra.mxu0 0.0
      %975 = vmatprep.subr.mxu0 0.0
      %976 = vmatpush1.msra.mxu0 0.0
      %977 = vmatprep.subr.mxu0 0.0
      %978 = vmatpush1.msra.mxu0 0.0
      %979 = vmatprep.subr.mxu0 0.0
      %980 = vmatpush1.msra.mxu0 0.0
      %981 = vmatprep.subr.mxu0 0.0
      %982 = vmatpush1.msra.mxu0 0.0
      %983 = vmatprep.subr.mxu0 0.0
      %984 = vmatpush1.msra.mxu0 0.0
      %985 = vmatprep.subr.mxu0 0.0
      %986 = vmatpush1.msra.mxu0 0.0
      %987 = vmatprep.subr.mxu0 0.0
      %988 = vmatpush1.msra.mxu0 0.0
      %989 = vmatprep.subr.mxu0 0.0
      %990 = vmatpush1.msra.mxu0 0.0
      %991 = vmatprep.subr.mxu0 0.0
      %992 = vmatpush1.msra.mxu0 0.0
      %993 = vmatprep.subr.mxu0 0.0
      %994 = vmatpush1.msra.mxu0 0.0
      %995 = vmatprep.subr.mxu0 0.0
      %996 = vmatpush1.msra.mxu0 0.0
      %997 = vmatprep.subr.mxu0 0.0
      %998 = vmatpush1.msra.mxu0 0.0
      %999 = vmatprep.subr.mxu0 0.0
      %1000 = vmatpush1.msra.mxu0 0.0
      %1001 = vmatprep.subr.mxu0 0.0
      %1002 = vmatpush1.msra.mxu0 0.0
      %1003 = vmatprep.subr.mxu0 0.0
      %1004 = vmatpush1.msra.mxu0 0.0
      %1005 = vmatprep.mubr.f32.mxu0 0.0
      %v1006 = vand.u32 %v746, 4294901760
      %1007 = vmatmul.mubr.f32.gmra.mrb[0].mxu0 %v1006
      %v1008 = vpop.f32.mrb[0].mxu0
      %v1009 = vadd.f32 %v858, %v1008
      %v1010 = vpop.f32.mrb[0].mxu0
      %1011 = vdwg.mxu0
      %1012 = vmatprep.subr.mxu0 0.0
      %v1013 = vand.u32 %v747, 4294901760
      %v1014 = vsub.f32 %v747, %v1013
      %1015 = vmatpush1.msra.mxu0 %v1014
      %1016 = vmatprep.subr.mxu0 0.0
      %v1017 = vand.u32 %v748, 4294901760
      %v1018 = vsub.f32 %v748, %v1017
      %1019 = vmatpush1.msra.mxu0 %v1018
      %1020 = vmatprep.subr.mxu0 0.0
      %v1021 = vand.u32 %v749, 4294901760
      %v1022 = vsub.f32 %v749, %v1021
      %1023 = vmatpush1.msra.mxu0 %v1022
      %1024 = vmatprep.subr.mxu0 0.0
      %v1025 = vand.u32 %v750, 4294901760
      %v1026 = vsub.f32 %v750, %v1025
      %1027 = vmatpush1.msra.mxu0 %v1026
      %1028 = vmatprep.subr.mxu0 0.0
      %v1029 = vand.u32 %v751, 4294901760
      %v1030 = vsub.f32 %v751, %v1029
      %1031 = vmatpush1.msra.mxu0 %v1030
      %1032 = vmatprep.subr.mxu0 0.0
      %v1033 = vand.u32 %v752, 4294901760
      %v1034 = vsub.f32 %v752, %v1033
      %1035 = vmatpush1.msra.mxu0 %v1034
      %1036 = vmatprep.subr.mxu0 0.0
      %v1037 = vand.u32 %v753, 4294901760
      %v1038 = vsub.f32 %v753, %v1037
      %1039 = vmatpush1.msra.mxu0 %v1038
      %1040 = vmatprep.subr.mxu0 0.0
      %v1041 = vand.u32 %v754, 4294901760
      %v1042 = vsub.f32 %v754, %v1041
      %1043 = vmatpush1.msra.mxu0 %v1042
      %1044 = vmatprep.subr.mxu0 0.0
      %v1045 = vand.u32 %v755, 4294901760
      %v1046 = vsub.f32 %v755, %v1045
      %1047 = vmatpush1.msra.mxu0 %v1046
      %1048 = vmatprep.subr.mxu0 0.0
      %v1049 = vand.u32 %v756, 4294901760
      %v1050 = vsub.f32 %v756, %v1049
      %1051 = vmatpush1.msra.mxu0 %v1050
      %1052 = vmatprep.subr.mxu0 0.0
      %v1053 = vand.u32 %v757, 4294901760
      %v1054 = vsub.f32 %v757, %v1053
      %1055 = vmatpush1.msra.mxu0 %v1054
      %1056 = vmatprep.subr.mxu0 0.0
      %v1057 = vand.u32 %v758, 4294901760
      %v1058 = vsub.f32 %v758, %v1057
      %1059 = vmatpush1.msra.mxu0 %v1058
      %1060 = vmatprep.subr.mxu0 0.0
      %v1061 = vand.u32 %v759, 4294901760
      %v1062 = vsub.f32 %v759, %v1061
      %1063 = vmatpush1.msra.mxu0 %v1062
      %1064 = vmatprep.subr.mxu0 0.0
      %v1065 = vand.u32 %v760, 4294901760
      %v1066 = vsub.f32 %v760, %v1065
      %1067 = vmatpush1.msra.mxu0 %v1066
      %1068 = vmatprep.subr.mxu0 0.0
      %v1069 = vand.u32 %v761, 4294901760
      %v1070 = vsub.f32 %v761, %v1069
      %1071 = vmatpush1.msra.mxu0 %v1070
      %1072 = vmatprep.subr.mxu0 0.0
      %v1073 = vand.u32 %v762, 4294901760
      %v1074 = vsub.f32 %v762, %v1073
      %1075 = vmatpush1.msra.mxu0 %v1074
      %1076 = vmatprep.subr.mxu0 0.0
      %1077 = vmatpush1.msra.mxu0 0.0
      %1078 = vmatprep.subr.mxu0 0.0
      %1079 = vmatpush1.msra.mxu0 0.0
      %1080 = vmatprep.subr.mxu0 0.0
      %1081 = vmatpush1.msra.mxu0 0.0
      %1082 = vmatprep.subr.mxu0 0.0
      %1083 = vmatpush1.msra.mxu0 0.0
      %1084 = vmatprep.subr.mxu0 0.0
      %1085 = vmatpush1.msra.mxu0 0.0
      %1086 = vmatprep.subr.mxu0 0.0
      %1087 = vmatpush1.msra.mxu0 0.0
      %1088 = vmatprep.subr.mxu0 0.0
      %1089 = vmatpush1.msra.mxu0 0.0
      %1090 = vmatprep.subr.mxu0 0.0
      %1091 = vmatpush1.msra.mxu0 0.0
      %1092 = vmatprep.subr.mxu0 0.0
      %1093 = vmatpush1.msra.mxu0 0.0
      %1094 = vmatprep.subr.mxu0 0.0
      %1095 = vmatpush1.msra.mxu0 0.0
      %1096 = vmatprep.subr.mxu0 0.0
      %1097 = vmatpush1.msra.mxu0 0.0
      %1098 = vmatprep.subr.mxu0 0.0
      %1099 = vmatpush1.msra.mxu0 0.0
      %1100 = vmatprep.subr.mxu0 0.0
      %1101 = vmatpush1.msra.mxu0 0.0
      %1102 = vmatprep.subr.mxu0 0.0
      %1103 = vmatpush1.msra.mxu0 0.0
      %1104 = vmatprep.subr.mxu0 0.0
      %1105 = vmatpush1.msra.mxu0 0.0
      %1106 = vmatprep.subr.mxu0 0.0
      %1107 = vmatpush1.msra.mxu0 0.0
      %1108 = vmatprep.mubr.f32.mxu0 0.0
      %v1109 = vand.u32 %v746, 4294901760
      %v1110 = vsub.f32 %v746, %v1109
      %1111 = vmatmul.mubr.f32.gmra.mrb[0].mxu0 %v1110
      %v1112 = vpop.f32.mrb[0].mxu0
      %v1113 = vadd.f32 %v1009, %v1112
      %v1114 = vpop.f32.mrb[0].mxu0
      %1115 = vdwg.mxu0
      %1116 = vmatprep.subr.mxu0 0.0
      %v1117 = vand.u32 %v747, 4294901760
      %1118 = vmatpush1.msra.mxu0 %v1117
      %1119 = vmatprep.subr.mxu0 0.0
      %v1120 = vand.u32 %v748, 4294901760
      %1121 = vmatpush1.msra.mxu0 %v1120
      %1122 = vmatprep.subr.mxu0 0.0
      %v1123 = vand.u32 %v749, 4294901760
      %1124 = vmatpush1.msra.mxu0 %v1123
      %1125 = vmatprep.subr.mxu0 0.0
      %v1126 = vand.u32 %v750, 4294901760
      %1127 = vmatpush1.msra.mxu0 %v1126
      %1128 = vmatprep.subr.mxu0 0.0
      %v1129 = vand.u32 %v751, 4294901760
      %1130 = vmatpush1.msra.mxu0 %v1129
      %1131 = vmatprep.subr.mxu0 0.0
      %v1132 = vand.u32 %v752, 4294901760
      %1133 = vmatpush1.msra.mxu0 %v1132
      %1134 = vmatprep.subr.mxu0 0.0
      %v1135 = vand.u32 %v753, 4294901760
      %1136 = vmatpush1.msra.mxu0 %v1135
      %1137 = vmatprep.subr.mxu0 0.0
      %v1138 = vand.u32 %v754, 4294901760
      %1139 = vmatpush1.msra.mxu0 %v1138
      %1140 = vmatprep.subr.mxu0 0.0
      %v1141 = vand.u32 %v755, 4294901760
      %1142 = vmatpush1.msra.mxu0 %v1141
      %1143 = vmatprep.subr.mxu0 0.0
      %v1144 = vand.u32 %v756, 4294901760
      %1145 = vmatpush1.msra.mxu0 %v1144
      %1146 = vmatprep.subr.mxu0 0.0
      %v1147 = vand.u32 %v757, 4294901760
      %1148 = vmatpush1.msra.mxu0 %v1147
      %1149 = vmatprep.subr.mxu0 0.0
      %v1150 = vand.u32 %v758, 4294901760
      %1151 = vmatpush1.msra.mxu0 %v1150
      %1152 = vmatprep.subr.mxu0 0.0
      %v1153 = vand.u32 %v759, 4294901760
      %1154 = vmatpush1.msra.mxu0 %v1153
      %1155 = vmatprep.subr.mxu0 0.0
      %v1156 = vand.u32 %v760, 4294901760
      %1157 = vmatpush1.msra.mxu0 %v1156
      %1158 = vmatprep.subr.mxu0 0.0
      %v1159 = vand.u32 %v761, 4294901760
      %1160 = vmatpush1.msra.mxu0 %v1159
      %1161 = vmatprep.subr.mxu0 0.0
      %v1162 = vand.u32 %v762, 4294901760
      %1163 = vmatpush1.msra.mxu0 %v1162
      %1164 = vmatprep.subr.mxu0 0.0
      %1165 = vmatpush1.msra.mxu0 0.0
      %1166 = vmatprep.subr.mxu0 0.0
      %1167 = vmatpush1.msra.mxu0 0.0
      %1168 = vmatprep.subr.mxu0 0.0
      %1169 = vmatpush1.msra.mxu0 0.0
      %1170 = vmatprep.subr.mxu0 0.0
      %1171 = vmatpush1.msra.mxu0 0.0
      %1172 = vmatprep.subr.mxu0 0.0
      %1173 = vmatpush1.msra.mxu0 0.0
      %1174 = vmatprep.subr.mxu0 0.0
      %1175 = vmatpush1.msra.mxu0 0.0
      %1176 = vmatprep.subr.mxu0 0.0
      %1177 = vmatpush1.msra.mxu0 0.0
      %1178 = vmatprep.subr.mxu0 0.0
      %1179 = vmatpush1.msra.mxu0 0.0
      %1180 = vmatprep.subr.mxu0 0.0
      %1181 = vmatpush1.msra.mxu0 0.0
      %1182 = vmatprep.subr.mxu0 0.0
      %1183 = vmatpush1.msra.mxu0 0.0
      %1184 = vmatprep.subr.mxu0 0.0
      %1185 = vmatpush1.msra.mxu0 0.0
      %1186 = vmatprep.subr.mxu0 0.0
      %1187 = vmatpush1.msra.mxu0 0.0
      %1188 = vmatprep.subr.mxu0 0.0
      %1189 = vmatpush1.msra.mxu0 0.0
      %1190 = vmatprep.subr.mxu0 0.0
      %1191 = vmatpush1.msra.mxu0 0.0
      %1192 = vmatprep.subr.mxu0 0.0
      %1193 = vmatpush1.msra.mxu0 0.0
      %1194 = vmatprep.subr.mxu0 0.0
      %1195 = vmatpush1.msra.mxu0 0.0
      %1196 = vmatprep.mubr.f32.mxu0 0.0
      %v1197 = vand.u32 %v746, 4294901760
      %v1198 = vsub.f32 %v746, %v1197
      %v1199 = vand.u32 %v1198, 4294901760
      %1200 = vmatmul.mubr.f32.gmra.mrb[0].mxu0 %v1199
      %v1201 = vpop.f32.mrb[0].mxu0
      %v1202 = vadd.f32 %v1113, %v1201
      %v1203 = vpop.f32.mrb[0].mxu0
      %1204 = vdwg.mxu0
      %1205 = vmatprep.subr.mxu0 0.0
      %v1206 = vand.u32 %v747, 4294901760
      %v1207 = vsub.f32 %v747, %v1206
      %v1208 = vand.u32 %v1207, 4294901760
      %1209 = vmatpush1.msra.mxu0 %v1208
      %1210 = vmatprep.subr.mxu0 0.0
      %v1211 = vand.u32 %v748, 4294901760
      %v1212 = vsub.f32 %v748, %v1211
      %v1213 = vand.u32 %v1212, 4294901760
      %1214 = vmatpush1.msra.mxu0 %v1213
      %1215 = vmatprep.subr.mxu0 0.0
      %v1216 = vand.u32 %v749, 4294901760
      %v1217 = vsub.f32 %v749, %v1216
      %v1218 = vand.u32 %v1217, 4294901760
      %1219 = vmatpush1.msra.mxu0 %v1218
      %1220 = vmatprep.subr.mxu0 0.0
      %v1221 = vand.u32 %v750, 4294901760
      %v1222 = vsub.f32 %v750, %v1221
      %v1223 = vand.u32 %v1222, 4294901760
      %1224 = vmatpush1.msra.mxu0 %v1223
      %1225 = vmatprep.subr.mxu0 0.0
      %v1226 = vand.u32 %v751, 4294901760
      %v1227 = vsub.f32 %v751, %v1226
      %v1228 = vand.u32 %v1227, 4294901760
      %1229 = vmatpush1.msra.mxu0 %v1228
      %1230 = vmatprep.subr.mxu0 0.0
      %v1231 = vand.u32 %v752, 4294901760
      %v1232 = vsub.f32 %v752, %v1231
      %v1233 = vand.u32 %v1232, 4294901760
      %1234 = vmatpush1.msra.mxu0 %v1233
      %1235 = vmatprep.subr.mxu0 0.0
      %v1236 = vand.u32 %v753, 4294901760
      %v1237 = vsub.f32 %v753, %v1236
      %v1238 = vand.u32 %v1237, 4294901760
      %1239 = vmatpush1.msra.mxu0 %v1238
      %1240 = vmatprep.subr.mxu0 0.0
      %v1241 = vand.u32 %v754, 4294901760
      %v1242 = vsub.f32 %v754, %v1241
      %v1243 = vand.u32 %v1242, 4294901760
      %1244 = vmatpush1.msra.mxu0 %v1243
      %1245 = vmatprep.subr.mxu0 0.0
      %v1246 = vand.u32 %v755, 4294901760
      %v1247 = vsub.f32 %v755, %v1246
      %v1248 = vand.u32 %v1247, 4294901760
      %1249 = vmatpush1.msra.mxu0 %v1248
      %1250 = vmatprep.subr.mxu0 0.0
      %v1251 = vand.u32 %v756, 4294901760
      %v1252 = vsub.f32 %v756, %v1251
      %v1253 = vand.u32 %v1252, 4294901760
      %1254 = vmatpush1.msra.mxu0 %v1253
      %1255 = vmatprep.subr.mxu0 0.0
      %v1256 = vand.u32 %v757, 4294901760
      %v1257 = vsub.f32 %v757, %v1256
      %v1258 = vand.u32 %v1257, 4294901760
      %1259 = vmatpush1.msra.mxu0 %v1258
      %1260 = vmatprep.subr.mxu0 0.0
      %v1261 = vand.u32 %v758, 4294901760
      %v1262 = vsub.f32 %v758, %v1261
      %v1263 = vand.u32 %v1262, 4294901760
      %1264 = vmatpush1.msra.mxu0 %v1263
      %1265 = vmatprep.subr.mxu0 0.0
      %v1266 = vand.u32 %v759, 4294901760
      %v1267 = vsub.f32 %v759, %v1266
      %v1268 = vand.u32 %v1267, 4294901760
      %1269 = vmatpush1.msra.mxu0 %v1268
      %1270 = vmatprep.subr.mxu0 0.0
      %v1271 = vand.u32 %v760, 4294901760
      %v1272 = vsub.f32 %v760, %v1271
      %v1273 = vand.u32 %v1272, 4294901760
      %1274 = vmatpush1.msra.mxu0 %v1273
      %1275 = vmatprep.subr.mxu0 0.0
      %v1276 = vand.u32 %v761, 4294901760
      %v1277 = vsub.f32 %v761, %v1276
      %v1278 = vand.u32 %v1277, 4294901760
      %1279 = vmatpush1.msra.mxu0 %v1278
      %1280 = vmatprep.subr.mxu0 0.0
      %v1281 = vand.u32 %v762, 4294901760
      %v1282 = vsub.f32 %v762, %v1281
      %v1283 = vand.u32 %v1282, 4294901760
      %1284 = vmatpush1.msra.mxu0 %v1283
      %1285 = vmatprep.subr.mxu0 0.0
      %1286 = vmatpush1.msra.mxu0 0.0
      %1287 = vmatprep.subr.mxu0 0.0
      %1288 = vmatpush1.msra.mxu0 0.0
      %1289 = vmatprep.subr.mxu0 0.0
      %1290 = vmatpush1.msra.mxu0 0.0
      %1291 = vmatprep.subr.mxu0 0.0
      %1292 = vmatpush1.msra.mxu0 0.0
      %1293 = vmatprep.subr.mxu0 0.0
      %1294 = vmatpush1.msra.mxu0 0.0
      %1295 = vmatprep.subr.mxu0 0.0
      %1296 = vmatpush1.msra.mxu0 0.0
      %1297 = vmatprep.subr.mxu0 0.0
      %1298 = vmatpush1.msra.mxu0 0.0
      %1299 = vmatprep.subr.mxu0 0.0
      %1300 = vmatpush1.msra.mxu0 0.0
      %1301 = vmatprep.subr.mxu0 0.0
      %1302 = vmatpush1.msra.mxu0 0.0
      %1303 = vmatprep.subr.mxu0 0.0
      %1304 = vmatpush1.msra.mxu0 0.0
      %1305 = vmatprep.subr.mxu0 0.0
      %1306 = vmatpush1.msra.mxu0 0.0
      %1307 = vmatprep.subr.mxu0 0.0
      %1308 = vmatpush1.msra.mxu0 0.0
      %1309 = vmatprep.subr.mxu0 0.0
      %1310 = vmatpush1.msra.mxu0 0.0
      %1311 = vmatprep.subr.mxu0 0.0
      %1312 = vmatpush1.msra.mxu0 0.0
      %1313 = vmatprep.subr.mxu0 0.0
      %1314 = vmatpush1.msra.mxu0 0.0
      %1315 = vmatprep.subr.mxu0 0.0
      %1316 = vmatpush1.msra.mxu0 0.0
      %1317 = vmatprep.mubr.f32.mxu0 0.0
      %v1318 = vand.u32 %v746, 4294901760
      %1319 = vmatmul.mubr.f32.gmra.mrb[0].mxu0 %v1318
      %v1320 = vpop.f32.mrb[0].mxu0
      %v1321 = vadd.f32 %v1202, %v1320
      %v1322 = vpop.f32.mrb[0].mxu0
      %1323 = vdwg.mxu0
      %1324 = vmatprep.subr.mxu0 0.0
      %v1325 = vand.u32 %v747, 4294901760
      %1326 = vmatpush1.msra.mxu0 %v1325
      %1327 = vmatprep.subr.mxu0 0.0
      %v1328 = vand.u32 %v748, 4294901760
      %1329 = vmatpush1.msra.mxu0 %v1328
      %1330 = vmatprep.subr.mxu0 0.0
      %v1331 = vand.u32 %v749, 4294901760
      %1332 = vmatpush1.msra.mxu0 %v1331
      %1333 = vmatprep.subr.mxu0 0.0
      %v1334 = vand.u32 %v750, 4294901760
      %1335 = vmatpush1.msra.mxu0 %v1334
      %1336 = vmatprep.subr.mxu0 0.0
      %v1337 = vand.u32 %v751, 4294901760
      %1338 = vmatpush1.msra.mxu0 %v1337
      %1339 = vmatprep.subr.mxu0 0.0
      %v1340 = vand.u32 %v752, 4294901760
      %1341 = vmatpush1.msra.mxu0 %v1340
      %1342 = vmatprep.subr.mxu0 0.0
      %v1343 = vand.u32 %v753, 4294901760
      %1344 = vmatpush1.msra.mxu0 %v1343
      %1345 = vmatprep.subr.mxu0 0.0
      %v1346 = vand.u32 %v754, 4294901760
      %1347 = vmatpush1.msra.mxu0 %v1346
      %1348 = vmatprep.subr.mxu0 0.0
      %v1349 = vand.u32 %v755, 4294901760
      %1350 = vmatpush1.msra.mxu0 %v1349
      %1351 = vmatprep.subr.mxu0 0.0
      %v1352 = vand.u32 %v756, 4294901760
      %1353 = vmatpush1.msra.mxu0 %v1352
      %1354 = vmatprep.subr.mxu0 0.0
      %v1355 = vand.u32 %v757, 4294901760
      %1356 = vmatpush1.msra.mxu0 %v1355
      %1357 = vmatprep.subr.mxu0 0.0
      %v1358 = vand.u32 %v758, 4294901760
      %1359 = vmatpush1.msra.mxu0 %v1358
      %1360 = vmatprep.subr.mxu0 0.0
      %v1361 = vand.u32 %v759, 4294901760
      %1362 = vmatpush1.msra.mxu0 %v1361
      %1363 = vmatprep.subr.mxu0 0.0
      %v1364 = vand.u32 %v760, 4294901760
      %1365 = vmatpush1.msra.mxu0 %v1364
      %1366 = vmatprep.subr.mxu0 0.0
      %v1367 = vand.u32 %v761, 4294901760
      %1368 = vmatpush1.msra.mxu0 %v1367
      %1369 = vmatprep.subr.mxu0 0.0
      %v1370 = vand.u32 %v762, 4294901760
      %1371 = vmatpush1.msra.mxu0 %v1370
      %1372 = vmatprep.subr.mxu0 0.0
      %1373 = vmatpush1.msra.mxu0 0.0
      %1374 = vmatprep.subr.mxu0 0.0
      %1375 = vmatpush1.msra.mxu0 0.0
      %1376 = vmatprep.subr.mxu0 0.0
      %1377 = vmatpush1.msra.mxu0 0.0
      %1378 = vmatprep.subr.mxu0 0.0
      %1379 = vmatpush1.msra.mxu0 0.0
      %1380 = vmatprep.subr.mxu0 0.0
      %1381 = vmatpush1.msra.mxu0 0.0
      %1382 = vmatprep.subr.mxu0 0.0
      %1383 = vmatpush1.msra.mxu0 0.0
      %1384 = vmatprep.subr.mxu0 0.0
      %1385 = vmatpush1.msra.mxu0 0.0
      %1386 = vmatprep.subr.mxu0 0.0
      %1387 = vmatpush1.msra.mxu0 0.0
      %1388 = vmatprep.subr.mxu0 0.0
      %1389 = vmatpush1.msra.mxu0 0.0
      %1390 = vmatprep.subr.mxu0 0.0
      %1391 = vmatpush1.msra.mxu0 0.0
      %1392 = vmatprep.subr.mxu0 0.0
      %1393 = vmatpush1.msra.mxu0 0.0
      %1394 = vmatprep.subr.mxu0 0.0
      %1395 = vmatpush1.msra.mxu0 0.0
      %1396 = vmatprep.subr.mxu0 0.0
      %1397 = vmatpush1.msra.mxu0 0.0
      %1398 = vmatprep.subr.mxu0 0.0
      %1399 = vmatpush1.msra.mxu0 0.0
      %1400 = vmatprep.subr.mxu0 0.0
      %1401 = vmatpush1.msra.mxu0 0.0
      %1402 = vmatprep.subr.mxu0 0.0
      %1403 = vmatpush1.msra.mxu0 0.0
      %1404 = vmatprep.mubr.f32.mxu0 0.0
      %v1405 = vand.u32 %v746, 4294901760
      %1406 = vmatmul.mubr.f32.gmra.mrb[0].mxu0 %v1405
      %v1407 = vpop.f32.mrb[0].mxu0
      %v1408 = vadd.f32 %v1321, %v1407
      %v1409 = vpop.f32.mrb[0].mxu0
      %1410 = vdwg.mxu0
      %v1411 = vmax.f32 %v1408, 0.0
      %v1412 = vld [vmem:[#allocation9] sm:$0xff]
      %v1413 = vld [vmem:[#allocation9 + $0x8] sm:$0xff]
      %v1414 = vld [vmem:[#allocation9 + $0x10] sm:$0xff]
      %v1415 = vld [vmem:[#allocation9 + $0x18] sm:$0xff]
      %v1416 = vld [vmem:[#allocation9 + $0x20] sm:$0xff]
      %v1417 = vld [vmem:[#allocation9 + $0x28] sm:$0xff]
      %v1418 = vld [vmem:[#allocation9 + $0x30] sm:$0xff]
      %v1419 = vld [vmem:[#allocation9 + $0x38] sm:$0xff]
      %v1420 = vld [vmem:[#allocation9 + $0x40] sm:$0xff]
      %v1421 = vld [vmem:[#allocation9 + $0x48] sm:$0xff]
      %v1422 = vld [vmem:[#allocation9 + $0x50] sm:$0xff]
      %v1423 = vld [vmem:[#allocation9 + $0x58] sm:$0xff]
      %v1424 = vld [vmem:[#allocation9 + $0x60] sm:$0xff]
      %v1425 = vld [vmem:[#allocation9 + $0x68] sm:$0xff]
      %v1426 = vld [vmem:[#allocation9 + $0x70] sm:$0xff]
      %v1427 = vld [vmem:[#allocation9 + $0x78] sm:$0xff]
      %v1428 = vld [vmem:[%s5] sm:$0x1]
      %v1430 = vlaneseq
      %v1431 = vshrl.u32 %v1430, 7
      %v1432 = vsub.s32 0, %v1431
      %v1433 = vrot.slane %v1428, %v1432
      %1435 = vmatprep.subr.mxu0 0.0
      %v1436 = vand.u32 %v1412, 4294901760
      %1437 = vmatpush1.msra.mxu0 %v1436
      %1438 = vmatprep.subr.mxu0 0.0
      %v1439 = vand.u32 %v1413, 4294901760
      %1440 = vmatpush1.msra.mxu0 %v1439
      %1441 = vmatprep.subr.mxu0 0.0
      %v1442 = vand.u32 %v1414, 4294901760
      %1443 = vmatpush1.msra.mxu0 %v1442
      %1444 = vmatprep.subr.mxu0 0.0
      %v1445 = vand.u32 %v1415, 4294901760
      %1446 = vmatpush1.msra.mxu0 %v1445
      %1447 = vmatprep.subr.mxu0 0.0
      %v1448 = vand.u32 %v1416, 4294901760
      %1449 = vmatpush1.msra.mxu0 %v1448
      %1450 = vmatprep.subr.mxu0 0.0
      %v1451 = vand.u32 %v1417, 4294901760
      %1452 = vmatpush1.msra.mxu0 %v1451
      %1453 = vmatprep.subr.mxu0 0.0
      %v1454 = vand.u32 %v1418, 4294901760
      %1455 = vmatpush1.msra.mxu0 %v1454
      %1456 = vmatprep.subr.mxu0 0.0
      %v1457 = vand.u32 %v1419, 4294901760
      %1458 = vmatpush1.msra.mxu0 %v1457
      %1459 = vmatprep.subr.mxu0 0.0
      %v1460 = vand.u32 %v1420, 4294901760
      %1461 = vmatpush1.msra.mxu0 %v1460
      %1462 = vmatprep.subr.mxu0 0.0
      %v1463 = vand.u32 %v1421, 4294901760
      %1464 = vmatpush1.msra.mxu0 %v1463
      %1465 = vmatprep.subr.mxu0 0.0
      %v1466 = vand.u32 %v1422, 4294901760
      %1467 = vmatpush1.msra.mxu0 %v1466
      %1468 = vmatprep.subr.mxu0 0.0
      %v1469 = vand.u32 %v1423, 4294901760
      %1470 = vmatpush1.msra.mxu0 %v1469
      %1471 = vmatprep.subr.mxu0 0.0
      %v1472 = vand.u32 %v1424, 4294901760
      %1473 = vmatpush1.msra.mxu0 %v1472
      %1474 = vmatprep.subr.mxu0 0.0
      %v1475 = vand.u32 %v1425, 4294901760
      %1476 = vmatpush1.msra.mxu0 %v1475
      %1477 = vmatprep.subr.mxu0 0.0
      %v1478 = vand.u32 %v1426, 4294901760
      %1479 = vmatpush1.msra.mxu0 %v1478
      %1480 = vmatprep.subr.mxu0 0.0
      %v1481 = vand.u32 %v1427, 4294901760
      %1482 = vmatpush1.msra.mxu0 %v1481
      %1483 = vmatprep.subr.mxu0 0.0
      %1484 = vmatpush1.msra.mxu0 0.0
      %1485 = vmatprep.subr.mxu0 0.0
      %1486 = vmatpush1.msra.mxu0 0.0
      %1487 = vmatprep.subr.mxu0 0.0
      %1488 = vmatpush1.msra.mxu0 0.0
      %1489 = vmatprep.subr.mxu0 0.0
      %1490 = vmatpush1.msra.mxu0 0.0
      %1491 = vmatprep.subr.mxu0 0.0
      %1492 = vmatpush1.msra.mxu0 0.0
      %1493 = vmatprep.subr.mxu0 0.0
      %1494 = vmatpush1.msra.mxu0 0.0
      %1495 = vmatprep.subr.mxu0 0.0
      %1496 = vmatpush1.msra.mxu0 0.0
      %1497 = vmatprep.subr.mxu0 0.0
      %1498 = vmatpush1.msra.mxu0 0.0
      %1499 = vmatprep.subr.mxu0 0.0
      %1500 = vmatpush1.msra.mxu0 0.0
      %1501 = vmatprep.subr.mxu0 0.0
      %1502 = vmatpush1.msra.mxu0 0.0
      %1503 = vmatprep.subr.mxu0 0.0
      %1504 = vmatpush1.msra.mxu0 0.0
      %1505 = vmatprep.subr.mxu0 0.0
      %1506 = vmatpush1.msra.mxu0 0.0
      %1507 = vmatprep.subr.mxu0 0.0
      %1508 = vmatpush1.msra.mxu0 0.0
      %1509 = vmatprep.subr.mxu0 0.0
      %1510 = vmatpush1.msra.mxu0 0.0
      %1511 = vmatprep.subr.mxu0 0.0
      %1512 = vmatpush1.msra.mxu0 0.0
      %1513 = vmatprep.subr.mxu0 0.0
      %1514 = vmatpush1.msra.mxu0 0.0
      %1515 = vmatprep.mubr.f32.mxu0 0.0
      %v1516 = vand.u32 %v1411, 4294901760
      %v1517 = vsub.f32 %v1411, %v1516
      %v1518 = vand.u32 %v1517, 4294901760
      %v1519 = vsub.f32 %v1517, %v1518
      %v1520 = vand.u32 %v1519, 4294901760
      %1521 = vmatmul.mubr.f32.gmra.mrb[0].mxu0 %v1520
      %v1522 = vpop.f32.mrb[0].mxu0
      %v1523 = vadd.f32 %v1433, %v1522
      %v1524 = vpop.f32.mrb[0].mxu0
      %1525 = vdwg.mxu0
      %1526 = vmatprep.subr.mxu0 0.0
      %v1527 = vand.u32 %v1412, 4294901760
      %v1528 = vsub.f32 %v1412, %v1527
      %v1529 = vand.u32 %v1528, 4294901760
      %v1530 = vsub.f32 %v1528, %v1529
      %v1531 = vand.u32 %v1530, 4294901760
      %1532 = vmatpush1.msra.mxu0 %v1531
      %1533 = vmatprep.subr.mxu0 0.0
      %v1534 = vand.u32 %v1413, 4294901760
      %v1535 = vsub.f32 %v1413, %v1534
      %v1536 = vand.u32 %v1535, 4294901760
      %v1537 = vsub.f32 %v1535, %v1536
      %v1538 = vand.u32 %v1537, 4294901760
      %1539 = vmatpush1.msra.mxu0 %v1538
      %1540 = vmatprep.subr.mxu0 0.0
      %v1541 = vand.u32 %v1414, 4294901760
      %v1542 = vsub.f32 %v1414, %v1541
      %v1543 = vand.u32 %v1542, 4294901760
      %v1544 = vsub.f32 %v1542, %v1543
      %v1545 = vand.u32 %v1544, 4294901760
      %1546 = vmatpush1.msra.mxu0 %v1545
      %1547 = vmatprep.subr.mxu0 0.0
      %v1548 = vand.u32 %v1415, 4294901760
      %v1549 = vsub.f32 %v1415, %v1548
      %v1550 = vand.u32 %v1549, 4294901760
      %v1551 = vsub.f32 %v1549, %v1550
      %v1552 = vand.u32 %v1551, 4294901760
      %1553 = vmatpush1.msra.mxu0 %v1552
      %1554 = vmatprep.subr.mxu0 0.0
      %v1555 = vand.u32 %v1416, 4294901760
      %v1556 = vsub.f32 %v1416, %v1555
      %v1557 = vand.u32 %v1556, 4294901760
      %v1558 = vsub.f32 %v1556, %v1557
      %v1559 = vand.u32 %v1558, 4294901760
      %1560 = vmatpush1.msra.mxu0 %v1559
      %1561 = vmatprep.subr.mxu0 0.0
      %v1562 = vand.u32 %v1417, 4294901760
      %v1563 = vsub.f32 %v1417, %v1562
      %v1564 = vand.u32 %v1563, 4294901760
      %v1565 = vsub.f32 %v1563, %v1564
      %v1566 = vand.u32 %v1565, 4294901760
      %1567 = vmatpush1.msra.mxu0 %v1566
      %1568 = vmatprep.subr.mxu0 0.0
      %v1569 = vand.u32 %v1418, 4294901760
      %v1570 = vsub.f32 %v1418, %v1569
      %v1571 = vand.u32 %v1570, 4294901760
      %v1572 = vsub.f32 %v1570, %v1571
      %v1573 = vand.u32 %v1572, 4294901760
      %1574 = vmatpush1.msra.mxu0 %v1573
      %1575 = vmatprep.subr.mxu0 0.0
      %v1576 = vand.u32 %v1419, 4294901760
      %v1577 = vsub.f32 %v1419, %v1576
      %v1578 = vand.u32 %v1577, 4294901760
      %v1579 = vsub.f32 %v1577, %v1578
      %v1580 = vand.u32 %v1579, 4294901760
      %1581 = vmatpush1.msra.mxu0 %v1580
      %1582 = vmatprep.subr.mxu0 0.0
      %v1583 = vand.u32 %v1420, 4294901760
      %v1584 = vsub.f32 %v1420, %v1583
      %v1585 = vand.u32 %v1584, 4294901760
      %v1586 = vsub.f32 %v1584, %v1585
      %v1587 = vand.u32 %v1586, 4294901760
      %1588 = vmatpush1.msra.mxu0 %v1587
      %1589 = vmatprep.subr.mxu0 0.0
      %v1590 = vand.u32 %v1421, 4294901760
      %v1591 = vsub.f32 %v1421, %v1590
      %v1592 = vand.u32 %v1591, 4294901760
      %v1593 = vsub.f32 %v1591, %v1592
      %v1594 = vand.u32 %v1593, 4294901760
      %1595 = vmatpush1.msra.mxu0 %v1594
      %1596 = vmatprep.subr.mxu0 0.0
      %v1597 = vand.u32 %v1422, 4294901760
      %v1598 = vsub.f32 %v1422, %v1597
      %v1599 = vand.u32 %v1598, 4294901760
      %v1600 = vsub.f32 %v1598, %v1599
      %v1601 = vand.u32 %v1600, 4294901760
      %1602 = vmatpush1.msra.mxu0 %v1601
      %1603 = vmatprep.subr.mxu0 0.0
      %v1604 = vand.u32 %v1423, 4294901760
      %v1605 = vsub.f32 %v1423, %v1604
      %v1606 = vand.u32 %v1605, 4294901760
      %v1607 = vsub.f32 %v1605, %v1606
      %v1608 = vand.u32 %v1607, 4294901760
      %1609 = vmatpush1.msra.mxu0 %v1608
      %1610 = vmatprep.subr.mxu0 0.0
      %v1611 = vand.u32 %v1424, 4294901760
      %v1612 = vsub.f32 %v1424, %v1611
      %v1613 = vand.u32 %v1612, 4294901760
      %v1614 = vsub.f32 %v1612, %v1613
      %v1615 = vand.u32 %v1614, 4294901760
      %1616 = vmatpush1.msra.mxu0 %v1615
      %1617 = vmatprep.subr.mxu0 0.0
      %v1618 = vand.u32 %v1425, 4294901760
      %v1619 = vsub.f32 %v1425, %v1618
      %v1620 = vand.u32 %v1619, 4294901760
      %v1621 = vsub.f32 %v1619, %v1620
      %v1622 = vand.u32 %v1621, 4294901760
      %1623 = vmatpush1.msra.mxu0 %v1622
      %1624 = vmatprep.subr.mxu0 0.0
      %v1625 = vand.u32 %v1426, 4294901760
      %v1626 = vsub.f32 %v1426, %v1625
      %v1627 = vand.u32 %v1626, 4294901760
      %v1628 = vsub.f32 %v1626, %v1627
      %v1629 = vand.u32 %v1628, 4294901760
      %1630 = vmatpush1.msra.mxu0 %v1629
      %1631 = vmatprep.subr.mxu0 0.0
      %v1632 = vand.u32 %v1427, 4294901760
      %v1633 = vsub.f32 %v1427, %v1632
      %v1634 = vand.u32 %v1633, 4294901760
      %v1635 = vsub.f32 %v1633, %v1634
      %v1636 = vand.u32 %v1635, 4294901760
      %1637 = vmatpush1.msra.mxu0 %v1636
      %1638 = vmatprep.subr.mxu0 0.0
      %1639 = vmatpush1.msra.mxu0 0.0
      %1640 = vmatprep.subr.mxu0 0.0
      %1641 = vmatpush1.msra.mxu0 0.0
      %1642 = vmatprep.subr.mxu0 0.0
      %1643 = vmatpush1.msra.mxu0 0.0
      %1644 = vmatprep.subr.mxu0 0.0
      %1645 = vmatpush1.msra.mxu0 0.0
      %1646 = vmatprep.subr.mxu0 0.0
      %1647 = vmatpush1.msra.mxu0 0.0
      %1648 = vmatprep.subr.mxu0 0.0
      %1649 = vmatpush1.msra.mxu0 0.0
      %1650 = vmatprep.subr.mxu0 0.0
      %1651 = vmatpush1.msra.mxu0 0.0
      %1652 = vmatprep.subr.mxu0 0.0
      %1653 = vmatpush1.msra.mxu0 0.0
      %1654 = vmatprep.subr.mxu0 0.0
      %1655 = vmatpush1.msra.mxu0 0.0
      %1656 = vmatprep.subr.mxu0 0.0
      %1657 = vmatpush1.msra.mxu0 0.0
      %1658 = vmatprep.subr.mxu0 0.0
      %1659 = vmatpush1.msra.mxu0 0.0
      %1660 = vmatprep.subr.mxu0 0.0
      %1661 = vmatpush1.msra.mxu0 0.0
      %1662 = vmatprep.subr.mxu0 0.0
      %1663 = vmatpush1.msra.mxu0 0.0
      %1664 = vmatprep.subr.mxu0 0.0
      %1665 = vmatpush1.msra.mxu0 0.0
      %1666 = vmatprep.subr.mxu0 0.0
      %1667 = vmatpush1.msra.mxu0 0.0
      %1668 = vmatprep.subr.mxu0 0.0
      %1669 = vmatpush1.msra.mxu0 0.0
      %1670 = vmatprep.mubr.f32.mxu0 0.0
      %v1671 = vand.u32 %v1411, 4294901760
      %1672 = vmatmul.mubr.f32.gmra.mrb[0].mxu0 %v1671
      %v1673 = vpop.f32.mrb[0].mxu0
      %v1674 = vadd.f32 %v1523, %v1673
      %v1675 = vpop.f32.mrb[0].mxu0
      %1676 = vdwg.mxu0
      %1677 = vmatprep.subr.mxu0 0.0
      %v1678 = vand.u32 %v1412, 4294901760
      %v1679 = vsub.f32 %v1412, %v1678
      %1680 = vmatpush1.msra.mxu0 %v1679
      %1681 = vmatprep.subr.mxu0 0.0
      %v1682 = vand.u32 %v1413, 4294901760
      %v1683 = vsub.f32 %v1413, %v1682
      %1684 = vmatpush1.msra.mxu0 %v1683
      %1685 = vmatprep.subr.mxu0 0.0
      %v1686 = vand.u32 %v1414, 4294901760
      %v1687 = vsub.f32 %v1414, %v1686
      %1688 = vmatpush1.msra.mxu0 %v1687
      %1689 = vmatprep.subr.mxu0 0.0
      %v1690 = vand.u32 %v1415, 4294901760
      %v1691 = vsub.f32 %v1415, %v1690
      %1692 = vmatpush1.msra.mxu0 %v1691
      %1693 = vmatprep.subr.mxu0 0.0
      %v1694 = vand.u32 %v1416, 4294901760
      %v1695 = vsub.f32 %v1416, %v1694
      %1696 = vmatpush1.msra.mxu0 %v1695
      %1697 = vmatprep.subr.mxu0 0.0
      %v1698 = vand.u32 %v1417, 4294901760
      %v1699 = vsub.f32 %v1417, %v1698
      %1700 = vmatpush1.msra.mxu0 %v1699
      %1701 = vmatprep.subr.mxu0 0.0
      %v1702 = vand.u32 %v1418, 4294901760
      %v1703 = vsub.f32 %v1418, %v1702
      %1704 = vmatpush1.msra.mxu0 %v1703
      %1705 = vmatprep.subr.mxu0 0.0
      %v1706 = vand.u32 %v1419, 4294901760
      %v1707 = vsub.f32 %v1419, %v1706
      %1708 = vmatpush1.msra.mxu0 %v1707
      %1709 = vmatprep.subr.mxu0 0.0
      %v1710 = vand.u32 %v1420, 4294901760
      %v1711 = vsub.f32 %v1420, %v1710
      %1712 = vmatpush1.msra.mxu0 %v1711
      %1713 = vmatprep.subr.mxu0 0.0
      %v1714 = vand.u32 %v1421, 4294901760
      %v1715 = vsub.f32 %v1421, %v1714
      %1716 = vmatpush1.msra.mxu0 %v1715
      %1717 = vmatprep.subr.mxu0 0.0
      %v1718 = vand.u32 %v1422, 4294901760
      %v1719 = vsub.f32 %v1422, %v1718
      %1720 = vmatpush1.msra.mxu0 %v1719
      %1721 = vmatprep.subr.mxu0 0.0
      %v1722 = vand.u32 %v1423, 4294901760
      %v1723 = vsub.f32 %v1423, %v1722
      %1724 = vmatpush1.msra.mxu0 %v1723
      %1725 = vmatprep.subr.mxu0 0.0
      %v1726 = vand.u32 %v1424, 4294901760
      %v1727 = vsub.f32 %v1424, %v1726
      %1728 = vmatpush1.msra.mxu0 %v1727
      %1729 = vmatprep.subr.mxu0 0.0
      %v1730 = vand.u32 %v1425, 4294901760
      %v1731 = vsub.f32 %v1425, %v1730
      %1732 = vmatpush1.msra.mxu0 %v1731
      %1733 = vmatprep.subr.mxu0 0.0
      %v1734 = vand.u32 %v1426, 4294901760
      %v1735 = vsub.f32 %v1426, %v1734
      %1736 = vmatpush1.msra.mxu0 %v1735
      %1737 = vmatprep.subr.mxu0 0.0
      %v1738 = vand.u32 %v1427, 4294901760
      %v1739 = vsub.f32 %v1427, %v1738
      %1740 = vmatpush1.msra.mxu0 %v1739
      %1741 = vmatprep.subr.mxu0 0.0
      %1742 = vmatpush1.msra.mxu0 0.0
      %1743 = vmatprep.subr.mxu0 0.0
      %1744 = vmatpush1.msra.mxu0 0.0
      %1745 = vmatprep.subr.mxu0 0.0
      %1746 = vmatpush1.msra.mxu0 0.0
      %1747 = vmatprep.subr.mxu0 0.0
      %1748 = vmatpush1.msra.mxu0 0.0
      %1749 = vmatprep.subr.mxu0 0.0
      %1750 = vmatpush1.msra.mxu0 0.0
      %1751 = vmatprep.subr.mxu0 0.0
      %1752 = vmatpush1.msra.mxu0 0.0
      %1753 = vmatprep.subr.mxu0 0.0
      %1754 = vmatpush1.msra.mxu0 0.0
      %1755 = vmatprep.subr.mxu0 0.0
      %1756 = vmatpush1.msra.mxu0 0.0
      %1757 = vmatprep.subr.mxu0 0.0
      %1758 = vmatpush1.msra.mxu0 0.0
      %1759 = vmatprep.subr.mxu0 0.0
      %1760 = vmatpush1.msra.mxu0 0.0
      %1761 = vmatprep.subr.mxu0 0.0
      %1762 = vmatpush1.msra.mxu0 0.0
      %1763 = vmatprep.subr.mxu0 0.0
      %1764 = vmatpush1.msra.mxu0 0.0
      %1765 = vmatprep.subr.mxu0 0.0
      %1766 = vmatpush1.msra.mxu0 0.0
      %1767 = vmatprep.subr.mxu0 0.0
      %1768 = vmatpush1.msra.mxu0 0.0
      %1769 = vmatprep.subr.mxu0 0.0
      %1770 = vmatpush1.msra.mxu0 0.0
      %1771 = vmatprep.subr.mxu0 0.0
      %1772 = vmatpush1.msra.mxu0 0.0
      %1773 = vmatprep.mubr.f32.mxu0 0.0
      %v1774 = vand.u32 %v1411, 4294901760
      %v1775 = vsub.f32 %v1411, %v1774
      %1776 = vmatmul.mubr.f32.gmra.mrb[0].mxu0 %v1775
      %v1777 = vpop.f32.mrb[0].mxu0
      %v1778 = vadd.f32 %v1674, %v1777
      %v1779 = vpop.f32.mrb[0].mxu0
      %1780 = vdwg.mxu0
      %1781 = vmatprep.subr.mxu0 0.0
      %v1782 = vand.u32 %v1412, 4294901760
      %1783 = vmatpush1.msra.mxu0 %v1782
      %1784 = vmatprep.subr.mxu0 0.0
      %v1785 = vand.u32 %v1413, 4294901760
      %1786 = vmatpush1.msra.mxu0 %v1785
      %1787 = vmatprep.subr.mxu0 0.0
      %v1788 = vand.u32 %v1414, 4294901760
      %1789 = vmatpush1.msra.mxu0 %v1788
      %1790 = vmatprep.subr.mxu0 0.0
      %v1791 = vand.u32 %v1415, 4294901760
      %1792 = vmatpush1.msra.mxu0 %v1791
      %1793 = vmatprep.subr.mxu0 0.0
      %v1794 = vand.u32 %v1416, 4294901760
      %1795 = vmatpush1.msra.mxu0 %v1794
      %1796 = vmatprep.subr.mxu0 0.0
      %v1797 = vand.u32 %v1417, 4294901760
      %1798 = vmatpush1.msra.mxu0 %v1797
      %1799 = vmatprep.subr.mxu0 0.0
      %v1800 = vand.u32 %v1418, 4294901760
      %1801 = vmatpush1.msra.mxu0 %v1800
      %1802 = vmatprep.subr.mxu0 0.0
      %v1803 = vand.u32 %v1419, 4294901760
      %1804 = vmatpush1.msra.mxu0 %v1803
      %1805 = vmatprep.subr.mxu0 0.0
      %v1806 = vand.u32 %v1420, 4294901760
      %1807 = vmatpush1.msra.mxu0 %v1806
      %1808 = vmatprep.subr.mxu0 0.0
      %v1809 = vand.u32 %v1421, 4294901760
      %1810 = vmatpush1.msra.mxu0 %v1809
      %1811 = vmatprep.subr.mxu0 0.0
      %v1812 = vand.u32 %v1422, 4294901760
      %1813 = vmatpush1.msra.mxu0 %v1812
      %1814 = vmatprep.subr.mxu0 0.0
      %v1815 = vand.u32 %v1423, 4294901760
      %1816 = vmatpush1.msra.mxu0 %v1815
      %1817 = vmatprep.subr.mxu0 0.0
      %v1818 = vand.u32 %v1424, 4294901760
      %1819 = vmatpush1.msra.mxu0 %v1818
      %1820 = vmatprep.subr.mxu0 0.0
      %v1821 = vand.u32 %v1425, 4294901760
      %1822 = vmatpush1.msra.mxu0 %v1821
      %1823 = vmatprep.subr.mxu0 0.0
      %v1824 = vand.u32 %v1426, 4294901760
      %1825 = vmatpush1.msra.mxu0 %v1824
      %1826 = vmatprep.subr.mxu0 0.0
      %v1827 = vand.u32 %v1427, 4294901760
      %1828 = vmatpush1.msra.mxu0 %v1827
      %1829 = vmatprep.subr.mxu0 0.0
      %1830 = vmatpush1.msra.mxu0 0.0
      %1831 = vmatprep.subr.mxu0 0.0
      %1832 = vmatpush1.msra.mxu0 0.0
      %1833 = vmatprep.subr.mxu0 0.0
      %1834 = vmatpush1.msra.mxu0 0.0
      %1835 = vmatprep.subr.mxu0 0.0
      %1836 = vmatpush1.msra.mxu0 0.0
      %1837 = vmatprep.subr.mxu0 0.0
      %1838 = vmatpush1.msra.mxu0 0.0
      %1839 = vmatprep.subr.mxu0 0.0
      %1840 = vmatpush1.msra.mxu0 0.0
      %1841 = vmatprep.subr.mxu0 0.0
      %1842 = vmatpush1.msra.mxu0 0.0
      %1843 = vmatprep.subr.mxu0 0.0
      %1844 = vmatpush1.msra.mxu0 0.0
      %1845 = vmatprep.subr.mxu0 0.0
      %1846 = vmatpush1.msra.mxu0 0.0
      %1847 = vmatprep.subr.mxu0 0.0
      %1848 = vmatpush1.msra.mxu0 0.0
      %1849 = vmatprep.subr.mxu0 0.0
      %1850 = vmatpush1.msra.mxu0 0.0
      %1851 = vmatprep.subr.mxu0 0.0
      %1852 = vmatpush1.msra.mxu0 0.0
      %1853 = vmatprep.subr.mxu0 0.0
      %1854 = vmatpush1.msra.mxu0 0.0
      %1855 = vmatprep.subr.mxu0 0.0
      %1856 = vmatpush1.msra.mxu0 0.0
      %1857 = vmatprep.subr.mxu0 0.0
      %1858 = vmatpush1.msra.mxu0 0.0
      %1859 = vmatprep.subr.mxu0 0.0
      %1860 = vmatpush1.msra.mxu0 0.0
      %1861 = vmatprep.mubr.f32.mxu0 0.0
      %v1862 = vand.u32 %v1411, 4294901760
      %v1863 = vsub.f32 %v1411, %v1862
      %v1864 = vand.u32 %v1863, 4294901760
      %1865 = vmatmul.mubr.f32.gmra.mrb[0].mxu0 %v1864
      %v1866 = vpop.f32.mrb[0].mxu0
      %v1867 = vadd.f32 %v1778, %v1866
      %v1868 = vpop.f32.mrb[0].mxu0
      %1869 = vdwg.mxu0
      %1870 = vmatprep.subr.mxu0 0.0
      %v1871 = vand.u32 %v1412, 4294901760
      %v1872 = vsub.f32 %v1412, %v1871
      %v1873 = vand.u32 %v1872, 4294901760
      %1874 = vmatpush1.msra.mxu0 %v1873
      %1875 = vmatprep.subr.mxu0 0.0
      %v1876 = vand.u32 %v1413, 4294901760
      %v1877 = vsub.f32 %v1413, %v1876
      %v1878 = vand.u32 %v1877, 4294901760
      %1879 = vmatpush1.msra.mxu0 %v1878
      %1880 = vmatprep.subr.mxu0 0.0
      %v1881 = vand.u32 %v1414, 4294901760
      %v1882 = vsub.f32 %v1414, %v1881
      %v1883 = vand.u32 %v1882, 4294901760
      %1884 = vmatpush1.msra.mxu0 %v1883
      %1885 = vmatprep.subr.mxu0 0.0
      %v1886 = vand.u32 %v1415, 4294901760
      %v1887 = vsub.f32 %v1415, %v1886
      %v1888 = vand.u32 %v1887, 4294901760
      %1889 = vmatpush1.msra.mxu0 %v1888
      %1890 = vmatprep.subr.mxu0 0.0
      %v1891 = vand.u32 %v1416, 4294901760
      %v1892 = vsub.f32 %v1416, %v1891
      %v1893 = vand.u32 %v1892, 4294901760
      %1894 = vmatpush1.msra.mxu0 %v1893
      %1895 = vmatprep.subr.mxu0 0.0
      %v1896 = vand.u32 %v1417, 4294901760
      %v1897 = vsub.f32 %v1417, %v1896
      %v1898 = vand.u32 %v1897, 4294901760
      %1899 = vmatpush1.msra.mxu0 %v1898
      %1900 = vmatprep.subr.mxu0 0.0
      %v1901 = vand.u32 %v1418, 4294901760
      %v1902 = vsub.f32 %v1418, %v1901
      %v1903 = vand.u32 %v1902, 4294901760
      %1904 = vmatpush1.msra.mxu0 %v1903
      %1905 = vmatprep.subr.mxu0 0.0
      %v1906 = vand.u32 %v1419, 4294901760
      %v1907 = vsub.f32 %v1419, %v1906
      %v1908 = vand.u32 %v1907, 4294901760
      %1909 = vmatpush1.msra.mxu0 %v1908
      %1910 = vmatprep.subr.mxu0 0.0
      %v1911 = vand.u32 %v1420, 4294901760
      %v1912 = vsub.f32 %v1420, %v1911
      %v1913 = vand.u32 %v1912, 4294901760
      %1914 = vmatpush1.msra.mxu0 %v1913
      %1915 = vmatprep.subr.mxu0 0.0
      %v1916 = vand.u32 %v1421, 4294901760
      %v1917 = vsub.f32 %v1421, %v1916
      %v1918 = vand.u32 %v1917, 4294901760
      %1919 = vmatpush1.msra.mxu0 %v1918
      %1920 = vmatprep.subr.mxu0 0.0
      %v1921 = vand.u32 %v1422, 4294901760
      %v1922 = vsub.f32 %v1422, %v1921
      %v1923 = vand.u32 %v1922, 4294901760
      %1924 = vmatpush1.msra.mxu0 %v1923
      %1925 = vmatprep.subr.mxu0 0.0
      %v1926 = vand.u32 %v1423, 4294901760
      %v1927 = vsub.f32 %v1423, %v1926
      %v1928 = vand.u32 %v1927, 4294901760
      %1929 = vmatpush1.msra.mxu0 %v1928
      %1930 = vmatprep.subr.mxu0 0.0
      %v1931 = vand.u32 %v1424, 4294901760
      %v1932 = vsub.f32 %v1424, %v1931
      %v1933 = vand.u32 %v1932, 4294901760
      %1934 = vmatpush1.msra.mxu0 %v1933
      %1935 = vmatprep.subr.mxu0 0.0
      %v1936 = vand.u32 %v1425, 4294901760
      %v1937 = vsub.f32 %v1425, %v1936
      %v1938 = vand.u32 %v1937, 4294901760
      %1939 = vmatpush1.msra.mxu0 %v1938
      %1940 = vmatprep.subr.mxu0 0.0
      %v1941 = vand.u32 %v1426, 4294901760
      %v1942 = vsub.f32 %v1426, %v1941
      %v1943 = vand.u32 %v1942, 4294901760
      %1944 = vmatpush1.msra.mxu0 %v1943
      %1945 = vmatprep.subr.mxu0 0.0
      %v1946 = vand.u32 %v1427, 4294901760
      %v1947 = vsub.f32 %v1427, %v1946
      %v1948 = vand.u32 %v1947, 4294901760
      %1949 = vmatpush1.msra.mxu0 %v1948
      %1950 = vmatprep.subr.mxu0 0.0
      %1951 = vmatpush1.msra.mxu0 0.0
      %1952 = vmatprep.subr.mxu0 0.0
      %1953 = vmatpush1.msra.mxu0 0.0
      %1954 = vmatprep.subr.mxu0 0.0
      %1955 = vmatpush1.msra.mxu0 0.0
      %1956 = vmatprep.subr.mxu0 0.0
      %1957 = vmatpush1.msra.mxu0 0.0
      %1958 = vmatprep.subr.mxu0 0.0
      %1959 = vmatpush1.msra.mxu0 0.0
      %1960 = vmatprep.subr.mxu0 0.0
      %1961 = vmatpush1.msra.mxu0 0.0
      %1962 = vmatprep.subr.mxu0 0.0
      %1963 = vmatpush1.msra.mxu0 0.0
      %1964 = vmatprep.subr.mxu0 0.0
      %1965 = vmatpush1.msra.mxu0 0.0
      %1966 = vmatprep.subr.mxu0 0.0
      %1967 = vmatpush1.msra.mxu0 0.0
      %1968 = vmatprep.subr.mxu0 0.0
      %1969 = vmatpush1.msra.mxu0 0.0
      %1970 = vmatprep.subr.mxu0 0.0
      %1971 = vmatpush1.msra.mxu0 0.0
      %1972 = vmatprep.subr.mxu0 0.0
      %1973 = vmatpush1.msra.mxu0 0.0
      %1974 = vmatprep.subr.mxu0 0.0
      %1975 = vmatpush1.msra.mxu0 0.0
      %1976 = vmatprep.subr.mxu0 0.0
      %1977 = vmatpush1.msra.mxu0 0.0
      %1978 = vmatprep.subr.mxu0 0.0
      %1979 = vmatpush1.msra.mxu0 0.0
      %1980 = vmatprep.subr.mxu0 0.0
      %1981 = vmatpush1.msra.mxu0 0.0
      %1982 = vmatprep.mubr.f32.mxu0 0.0
      %v1983 = vand.u32 %v1411, 4294901760
      %1984 = vmatmul.mubr.f32.gmra.mrb[0].mxu0 %v1983
      %v1985 = vpop.f32.mrb[0].mxu0
      %v1986 = vadd.f32 %v1867, %v1985
      %v1987 = vpop.f32.mrb[0].mxu0
      %1988 = vdwg.mxu0
      %1989 = vmatprep.subr.mxu0 0.0
      %v1990 = vand.u32 %v1412, 4294901760
      %1991 = vmatpush1.msra.mxu0 %v1990
      %1992 = vmatprep.subr.mxu0 0.0
      %v1993 = vand.u32 %v1413, 4294901760
      %1994 = vmatpush1.msra.mxu0 %v1993
      %1995 = vmatprep.subr.mxu0 0.0
      %v1996 = vand.u32 %v1414, 4294901760
      %1997 = vmatpush1.msra.mxu0 %v1996
      %1998 = vmatprep.subr.mxu0 0.0
      %v1999 = vand.u32 %v1415, 4294901760
      %2000 = vmatpush1.msra.mxu0 %v1999
      %2001 = vmatprep.subr.mxu0 0.0
      %v2002 = vand.u32 %v1416, 4294901760
      %2003 = vmatpush1.msra.mxu0 %v2002
      %2004 = vmatprep.subr.mxu0 0.0
      %v2005 = vand.u32 %v1417, 4294901760
      %2006 = vmatpush1.msra.mxu0 %v2005
      %2007 = vmatprep.subr.mxu0 0.0
      %v2008 = vand.u32 %v1418, 4294901760
      %2009 = vmatpush1.msra.mxu0 %v2008
      %2010 = vmatprep.subr.mxu0 0.0
      %v2011 = vand.u32 %v1419, 4294901760
      %2012 = vmatpush1.msra.mxu0 %v2011
      %2013 = vmatprep.subr.mxu0 0.0
      %v2014 = vand.u32 %v1420, 4294901760
      %2015 = vmatpush1.msra.mxu0 %v2014
      %2016 = vmatprep.subr.mxu0 0.0
      %v2017 = vand.u32 %v1421, 4294901760
      %2018 = vmatpush1.msra.mxu0 %v2017
      %2019 = vmatprep.subr.mxu0 0.0
      %v2020 = vand.u32 %v1422, 4294901760
      %2021 = vmatpush1.msra.mxu0 %v2020
      %2022 = vmatprep.subr.mxu0 0.0
      %v2023 = vand.u32 %v1423, 4294901760
      %2024 = vmatpush1.msra.mxu0 %v2023
      %2025 = vmatprep.subr.mxu0 0.0
      %v2026 = vand.u32 %v1424, 4294901760
      %2027 = vmatpush1.msra.mxu0 %v2026
      %2028 = vmatprep.subr.mxu0 0.0
      %v2029 = vand.u32 %v1425, 4294901760
      %2030 = vmatpush1.msra.mxu0 %v2029
      %2031 = vmatprep.subr.mxu0 0.0
      %v2032 = vand.u32 %v1426, 4294901760
      %2033 = vmatpush1.msra.mxu0 %v2032
      %2034 = vmatprep.subr.mxu0 0.0
      %v2035 = vand.u32 %v1427, 4294901760
      %2036 = vmatpush1.msra.mxu0 %v2035
      %2037 = vmatprep.subr.mxu0 0.0
      %2038 = vmatpush1.msra.mxu0 0.0
      %2039 = vmatprep.subr.mxu0 0.0
      %2040 = vmatpush1.msra.mxu0 0.0
      %2041 = vmatprep.subr.mxu0 0.0
      %2042 = vmatpush1.msra.mxu0 0.0
      %2043 = vmatprep.subr.mxu0 0.0
      %2044 = vmatpush1.msra.mxu0 0.0
      %2045 = vmatprep.subr.mxu0 0.0
      %2046 = vmatpush1.msra.mxu0 0.0
      %2047 = vmatprep.subr.mxu0 0.0
      %2048 = vmatpush1.msra.mxu0 0.0
      %2049 = vmatprep.subr.mxu0 0.0
      %2050 = vmatpush1.msra.mxu0 0.0
      %2051 = vmatprep.subr.mxu0 0.0
      %2052 = vmatpush1.msra.mxu0 0.0
      %2053 = vmatprep.subr.mxu0 0.0
      %2054 = vmatpush1.msra.mxu0 0.0
      %2055 = vmatprep.subr.mxu0 0.0
      %2056 = vmatpush1.msra.mxu0 0.0
      %2057 = vmatprep.subr.mxu0 0.0
      %2058 = vmatpush1.msra.mxu0 0.0
      %2059 = vmatprep.subr.mxu0 0.0
      %2060 = vmatpush1.msra.mxu0 0.0
      %2061 = vmatprep.subr.mxu0 0.0
      %2062 = vmatpush1.msra.mxu0 0.0
      %2063 = vmatprep.subr.mxu0 0.0
      %2064 = vmatpush1.msra.mxu0 0.0
      %2065 = vmatprep.subr.mxu0 0.0
      %2066 = vmatpush1.msra.mxu0 0.0
      %2067 = vmatprep.subr.mxu0 0.0
      %2068 = vmatpush1.msra.mxu0 0.0
      %2069 = vmatprep.mubr.f32.mxu0 0.0
      %v2070 = vand.u32 %v1411, 4294901760
      %2071 = vmatmul.mubr.f32.gmra.mrb[0].mxu0 %v2070
      %v2072 = vpop.f32.mrb[0].mxu0
      %v2073 = vadd.f32 %v1986, %v2072
      %v2074 = vpop.f32.mrb[0].mxu0
      %2075 = vdwg.mxu0
      %2076 = vst [vmem:[#allocation11] sm:$0xff] %v2073
    $region49: #{tpu_custom_call.1} parent=1 // pred_fallthru
      _
    // Predicated region
    $region50: #{tpu_custom_call.1} parent=1 // pred_check
      _
    $region51: #{tpu_custom_call.1} parent=1 // pred_check_branch
      %2078 = sbr.rel (0) target = $region53
    $region52: #{tpu_custom_call.1} parent=1 // pred_region
      %s2080 = ssub.s32 128, 128
      %2081 = vsyncadd [#allocation5], %s2080
      %s2083 = sshll.u32 [#allocation11], 4
      %s2084 = int_to_ptr.vmem [resolvable:$true] %s2083
      %2086 = dma.vmem_to_hbm [thread:$0]  %s2084, 128, %s6, [#allocation5]
    $region53: #{tpu_custom_call.1} parent=1 // pred_fallthru
      _
    // Predicated region
    $region54: #{tpu_custom_call.1} parent=1 // pred_check
      _
    $region55: #{tpu_custom_call.1} parent=1 // pred_check_branch
      %2088 = sbr.rel (0) target = $region57
    $region56: #{tpu_custom_call.1} parent=1 // pred_region
      %2089 = dma.done [#allocation5], 128
    $region57: #{tpu_custom_call.1} parent=1 // pred_fallthru
      _
    %2090 = vsyncpa [#allocation4], 1
    %2091 = vsyncpa [#allocation7], 1
    %2092 = vsyncpa [#allocation10], 1
    %2093 = vsyncpa [#allocation5], 1

</llo_original>
